<compile_context>
chip_gen: v6e
topology: v6e:2x2x1
jax: 0.10.0
libtpu: 0.0.40
codegen_flags: <defaults>
</compile_context>

<pallas_src>
import functools

import jax
import jax.numpy as jnp
from jax import lax
from jax.experimental import pallas as pl
from jax.experimental.pallas import tpu as pltpu

_MiB = 1024 * 1024
# Per-step pipeline footprint budgets used when auto-picking tiles.  Chosen so
# double-buffered blocks + f32 hinge temporaries stay inside the 32 MiB scoped
# VMEM default on every generation (v7x physical VMEM is only 64 MiB).
_PASS1_VMEM_BUDGET = 24 * _MiB
_PASS2_VMEM_BUDGET = 24 * _MiB
# Keep the whole normalized `s` matrix VMEM-resident in Pass 2 when its
# (double-buffered) bf16 copy stays under this bound.
_RESIDENT_S_BYTES = 8 * _MiB


def _pick_tile(n, target, steps=(128, 8)):
    """Largest `step`-aligned divisor of n that is <= target, else n itself."""
    if n <= target:
        return n
    for step in steps:
        t = (min(target, n) // step) * step
        while t >= step:
            if n % t == 0:
                return t
            t -= step
    # TODO(synk): pad N to a multiple of 128 instead of falling back to a full
    # (n, n) tile when n has no aligned divisor; guarded by the VMEM check below.
    return n


def _vmem_limit(bytes_needed):
    """Explicit scoped-VMEM limit with headroom, safe on v5e/v6e/v7x."""
    return int(min(max(int(bytes_needed * 1.5), 32 * _MiB), 56 * _MiB))


# ----------------------------- Pass 1 kernel ---------------------------------
def _normalize_diag_kernel(im_ref, s_ref, im_bf_ref, s_bf_ref, d_ref):
    im = im_ref[...].astype(jnp.float32)
    s = s_ref[...].astype(jnp.float32)
    # rsqrt runs on the EUP (its own VLIW slot) -> no sqrt + divide on the VALU.
    # NOTE: zero-norm rows give inf/nan, same as the PyTorch reference.
    im_n = im * lax.rsqrt(jnp.sum(im * im, axis=1, keepdims=True))
    s_n = s * lax.rsqrt(jnp.sum(s * s, axis=1, keepdims=True))
    # diag(im_n @ s_n.T) computed directly as a row-wise dot (O(N*D), f32).
    d_ref[...] = jnp.sum(im_n * s_n, axis=1, keepdims=True)
    # bf16 copies feed the MXU in Pass 2; elementwise math above stays f32.
    im_bf_ref[...] = im_n.astype(jnp.bfloat16)
    s_bf_ref[...] = s_n.astype(jnp.bfloat16)


# ----------------------------- Pass 2 kernel ---------------------------------
def _hinge_tile_kernel(im_ref, s_ref, md_row_ref, md_col_ref, out_ref, acc_ref,
                       *, tm, tn, s_resident):
    i = pl.program_id(0)
    j = pl.program_id(1)
    gn = pl.num_programs(1)

    @pl.when(j == 0)
    def _():
        acc_ref[...] = jnp.zeros_like(acc_ref)

    row_start = pl.multiple_of(i * tm, tm)
    col_start = pl.multiple_of(j * tn, tn)

    # (tn, d) bf16 RHS block: sliced out of the fully VMEM-resident copy when
    # it fits (zero per-step DMA), otherwise delivered by the BlockSpec pipeline.
    if s_resident:
        s_blk = s_ref[pl.ds(col_start, tn), :]
    else:
        s_blk = s_ref[...]

    # (tm, tn) score tile on the MXU: NT contraction, bf16 in / f32 accumulate.
    scores = lax.dot_general(
        im_ref[...], s_blk,
        dimension_numbers=(((1,), (1,)), ((), ())),
        preferred_element_type=jnp.float32)

    # margin - d sliced from VMEM-resident copies (no per-step tiny DMAs, no
    # in-kernel skinny transpose).
    md_row = md_row_ref[pl.ds(row_start, tm), :]   # (tm, 1): margin - d[i]
    md_col = md_col_ref[pl.ds(j, 1), :]            # (1, tn): margin - d[j]

    cost_s = jnp.maximum(md_col + scores, 0.0)     # column broadcast
    cost_im = jnp.maximum(md_row + scores, 0.0)    # row broadcast

    # Row-sum each cost separately (one fewer (tm, tn) VALU add), then reduce.
    row_part = (jnp.sum(cost_s, axis=1, keepdims=True)
                + jnp.sum(cost_im, axis=1, keepdims=True))         # (tm, 1)
    acc_ref[...] += jnp.sum(row_part, axis=0, keepdims=True)        # (1, 1)

    # Exact diagonal removal (matches the reference's zeroed diagonal for any
    # margin, incl. margin <= 0).  Only evaluated for tiles that intersect the
    # diagonal, so the mask/select work is amortized ~1/gn.
    has_diag = jnp.logical_and(row_start < col_start + tn,
                               col_start < row_start + tm)

    @pl.when(has_diag)
    def _():
        rows = lax.broadcasted_iota(jnp.int32, (tm, tn), 0) + row_start
        cols = lax.broadcasted_iota(jnp.int32, (tm, tn), 1) + col_start
        diag_terms = jnp.where(rows == cols, cost_s + cost_im, 0.0)
        dsum = jnp.sum(jnp.sum(diag_terms, axis=1, keepdims=True),
                       axis=0, keepdims=True)
        acc_ref[...] -= dsum

    # Write the per-row-block partial once, after the last column block.
    @pl.when(j == gn - 1)
    def _():
        out_ref[...] = jnp.broadcast_to(acc_ref[...], out_ref.shape)


# ------------------------------- Wrapper -------------------------------------
def pairwise_ranking_loss(im, s, margin=1.0, *, tile_m=None, tile_n=None,
                          tile_r=None):
    """Pallas TPU implementation of PairwiseRankingLoss.forward."""
    n, d = im.shape
    assert s.shape == (n, d)
    margin = float(margin)

    # ---- Pass 1: normalize + bf16 cast + diagonal ----------------------------
    # Memory-bound elementwise work: grow the row tile toward 512-1024 within
    # the VMEM budget (2 bufs x (f32 in + bf16 out) + lane-padded diag).
    per_row1 = 2 * (2 * d * 4 + 2 * d * 2 + 128 * 4)
    tr_cap = max(8, _PASS1_VMEM_BUDGET // per_row1)
    tr = _pick_tile(n, min(tile_r if tile_r is not None else 1024, tr_cap))
    vmem1 = tr * per_row1

    im_n, s_n, diag = pl.pallas_call(
        _normalize_diag_kernel,
        out_shape=(
            jax.ShapeDtypeStruct((n, d), jnp.bfloat16),
            jax.ShapeDtypeStruct((n, d), jnp.bfloat16),
            jax.ShapeDtypeStruct((n, 1), jnp.float32),
        ),
        grid=(n // tr,),
        in_specs=[
            pl.BlockSpec((tr, d), lambda r: (r, 0)),
            pl.BlockSpec((tr, d), lambda r: (r, 0)),
        ],
        out_specs=(
            pl.BlockSpec((tr, d), lambda r: (r, 0)),
            pl.BlockSpec((tr, d), lambda r: (r, 0)),
            pl.BlockSpec((tr, 1), lambda r: (r, 0)),
        ),
        compiler_params=pltpu.CompilerParams(
            dimension_semantics=("parallel",),
            vmem_limit_bytes=_vmem_limit(vmem1)),
        cost_estimate=pl.CostEstimate(
            flops=10 * n * d,
            transcendentals=2 * n,
            bytes_accessed=2 * n * d * 4 + 2 * n * d * 2 + n * 4),
    )(im, s)

    # ---- Pass 2 tiling --------------------------------------------------------
    tn = _pick_tile(n, tile_n if tile_n is not None else 256)
    gn = n // tn

    s_resident = 2 * n * d * 2 <= _RESIDENT_S_BYTES
    s_bytes = 2 * n * d * 2 if s_resident else 3 * tn * d * 2
    # Per row of tm: double-buffered bf16 im block + f32 score/hinge temporaries.
    per_row2 = 2 * d * 2 + 4 * tn * 4
    tm_cap = max(8, (_PASS2_VMEM_BUDGET - s_bytes) // per_row2)
    tm = _pick_tile(n, min(tile_m if tile_m is not None else 512, tm_cap))
    if tile_m is None and n // tm < 2 and n >= 16:
        # Keep the "parallel" row axis splittable across v7x's two TensorCores.
        tm = _pick_tile(n, max(8, n // 2))
    gm = n // tm

    vmem2 = (2 * tm * d * 2 + s_bytes          # im block (x2) + s operand
             + 2 * n * 128 * 4                 # resident (n,1) margin-d (lane padded)
             + 2 * gn * tn * 4                 # resident (gn,tn) margin-d
             + 4 * tm * tn * 4                 # f32 score / hinge temporaries
             + 2 * 8 * 128 * 4 + 8 * 128 * 4)  # output blocks + (1,1) accumulator
    if vmem2 > 2 * _PASS2_VMEM_BUDGET:
        raise ValueError(
            f"Pass-2 tiles (tm={tm}, tn={tn}) need ~{vmem2 / _MiB:.1f} MiB of "
            "VMEM; pad N to a 128-friendly size or pass smaller tile_m/tile_n.")

    # margin - d in two VMEM-resident layouts: (n,1) for row (sublane) slicing
    # and (gn,tn) for per-column-block slicing.
    md = margin - diag                  # (n, 1) f32
    md_cols = md.reshape(gn, tn)        # row j = margin - d over column block j

    if s_resident:
        s_spec = pl.BlockSpec((n, d), lambda i, j: (0, 0))   # fetched once, resident
    else:
        try:
            # Deeper buffering keeps the MXU fed on v5e, where the s-tile DMA
            # time is ~1:1 with the matmul time.
            s_spec = pl.BlockSpec((tn, d), lambda i, j: (j, 0),
                                  pipeline_mode=pl.Buffered(3))
        except (TypeError, AttributeError):
            s_spec = pl.BlockSpec((tn, d), lambda i, j: (j, 0))

    kernel = functools.partial(_hinge_tile_kernel, tm=tm, tn=tn,
                               s_resident=s_resident)

    partials = pl.pallas_call(
        kernel,
        out_shape=jax.ShapeDtypeStruct((gm * 8, 128), jnp.float32),
        grid=(gm, gn),
        in_specs=[
            pl.BlockSpec((tm, d), lambda i, j: (i, 0)),   # im row block (resident over j)
            s_spec,                                        # s_n (resident or column blocks)
            pl.BlockSpec((n, 1), lambda i, j: (0, 0)),     # margin - d[i] (resident)
            pl.BlockSpec((gn, tn), lambda i, j: (0, 0)),   # margin - d[j] (resident)
        ],
        out_specs=pl.BlockSpec((8, 128), lambda i, j: (i, 0)),
        scratch_shapes=[pltpu.VMEM((1, 1), jnp.float32)],
        compiler_params=pltpu.CompilerParams(
            dimension_semantics=("parallel", "arbitrary"),
            vmem_limit_bytes=_vmem_limit(vmem2)),
        cost_estimate=pl.CostEstimate(
            flops=2 * n * n * d + 6 * n * n,
            transcendentals=0,
            bytes_accessed=(n * d * 2
                            + (n * d * 2 if s_resident else gm * n * d * 2)
                            + 2 * n * 4 + gm * 8 * 128 * 4)),
    )(im_n, s_n, md, md_cols)

    # One partial per row block, broadcast over its (8, 128) output tile.
    total = jnp.sum(partials[::8, 0])
    return total / n


# ------------------------------ Reference ------------------------------------
def _reference_loss(im, s, margin=1.0):
    im = im / jnp.linalg.norm(im, axis=1, keepdims=True)
    s = s / jnp.linalg.norm(s, axis=1, keepdims=True)
    scores = im @ s.T
    dg = jnp.diag(scores)
    cost_s = jnp.maximum(0.0, (margin - dg)[None, :] + scores)
    cost_im = jnp.maximum(0.0, (margin - dg)[:, None] + scores)
    n = scores.shape[0]
    mask = 1.0 - jnp.eye(n)
    return (jnp.sum(cost_s * mask) + jnp.sum(cost_im * mask)) / n


if __name__ == "__main__":
    key = jax.random.PRNGKey(0)
    k_im, k_s = jax.random.split(key)
    # Small embedding matrices; auto-picked tiles give a 2x2 score-tile grid
    # (tm = tn = 256), exercising the resident-s / resident-diag path, the
    # per-row-block accumulation, and the diagonal-overlap correction.
    N, D = 512, 128
    im = jax.random.normal(k_im, (N, D), dtype=jnp.float32)
    s = jax.random.normal(k_s, (N, D), dtype=jnp.float32)

    ref1 = jax.block_until_ready(_reference_loss(im, s, margin=1.0))
    loss1 = jax.block_until_ready(pairwise_ranking_loss(im, s, margin=1.0))
    assert jnp.allclose(loss1, ref1, rtol=5e-3, atol=5e-2), (loss1, ref1)

    # Non-square tiles: the diagonal crosses several (i, j) tiles, exercising
    # the pl.when(has_diag) correction on multiple row/column block pairs.
    loss2 = jax.block_until_ready(
        pairwise_ranking_loss(im, s, margin=1.0, tile_m=128, tile_n=256))
    assert jnp.allclose(loss2, ref1, rtol=5e-3, atol=5e-2), (loss2, ref1)

    # Zero margin: the exact in-kernel diagonal removal (no analytic
    # max(0, margin) shortcut) keeps this correct for margin <= 0 as well.
    ref3 = jax.block_until_ready(_reference_loss(im, s, margin=0.0))
    loss3 = jax.block_until_ready(pairwise_ranking_loss(im, s, margin=0.0))
    assert jnp.allclose(loss3, ref3, rtol=5e-3, atol=5e-2), (loss3, ref3)

    print("KERNEL_OK")
</pallas_src>

<mosaic_0001>
module attributes {stable_mosaic.version = 11 : i64} {
  func.func @_normalize_diag_kernel(%arg0: i32, %arg1: memref<512x128xf32, #tpu.memory_space<vmem>>, %arg2: memref<512x128xf32, #tpu.memory_space<vmem>>, %arg3: memref<512x128xbf16, #tpu.memory_space<vmem>>, %arg4: memref<512x128xbf16, #tpu.memory_space<vmem>>, %arg5: memref<512x1xf32, #tpu.memory_space<vmem>>) attributes {dimension_semantics = [#tpu.dimension_semantics<parallel>], iteration_bounds = array<i64: 1>, scalar_prefetch = 0 : i64, scratch_operands = 0 : i64, tpu.core_type = #tpu.core_type<tc>, window_params = [{transform_indices = @transform_0, window_bounds = array<i64: 512, 128>}, {transform_indices = @transform_1, window_bounds = array<i64: 512, 128>}, {transform_indices = @transform_2, window_bounds = array<i64: 512, 128>}, {transform_indices = @transform_3, window_bounds = array<i64: 512, 128>}, {transform_indices = @transform_4, window_bounds = array<i64: 512, 1>}]} {
    %c0 = arith.constant 0 : index
    %c0_0 = arith.constant 0 : index
    %0 = vector.load %arg1[%c0, %c0_0] : memref<512x128xf32, #tpu.memory_space<vmem>>, vector<512x128xf32>
    %c0_1 = arith.constant 0 : index
    %c0_2 = arith.constant 0 : index
    %1 = vector.load %arg2[%c0_1, %c0_2] : memref<512x128xf32, #tpu.memory_space<vmem>>, vector<512x128xf32>
    %2 = arith.mulf %0, %0 : vector<512x128xf32>
    %cst = arith.constant dense<0.000000e+00> : vector<512xf32>
    %3 = vector.multi_reduction <add>, %2, %cst [1] : vector<512x128xf32> to vector<512xf32>
    %4 = vector.shape_cast %3 : vector<512xf32> to vector<512x1xf32>
    %5 = math.rsqrt %4 : vector<512x1xf32>
    %6 = vector.broadcast %5 : vector<512x1xf32> to vector<512x128xf32>
    %7 = arith.mulf %0, %6 : vector<512x128xf32>
    %8 = arith.mulf %1, %1 : vector<512x128xf32>
    %cst_3 = arith.constant dense<0.000000e+00> : vector<512xf32>
    %9 = vector.multi_reduction <add>, %8, %cst_3 [1] : vector<512x128xf32> to vector<512xf32>
    %10 = vector.shape_cast %9 : vector<512xf32> to vector<512x1xf32>
    %11 = math.rsqrt %10 : vector<512x1xf32>
    %12 = vector.broadcast %11 : vector<512x1xf32> to vector<512x128xf32>
    %13 = arith.mulf %1, %12 : vector<512x128xf32>
    %14 = arith.mulf %7, %13 : vector<512x128xf32>
    %cst_4 = arith.constant dense<0.000000e+00> : vector<512xf32>
    %15 = vector.multi_reduction <add>, %14, %cst_4 [1] : vector<512x128xf32> to vector<512xf32>
    %16 = vector.shape_cast %15 : vector<512xf32> to vector<512x1xf32>
    %c0_5 = arith.constant 0 : index
    %c0_6 = arith.constant 0 : index
    %17 = vector.load %arg5[%c0_5, %c0_6] : memref<512x1xf32, #tpu.memory_space<vmem>>, vector<512x1xf32>
    tpu.vector_store %arg5[%c0_5, %c0_6], %16 {strides = array<i32>} : memref<512x1xf32, #tpu.memory_space<vmem>>, vector<512x1xf32>,
    %18 = arith.truncf %7 : vector<512x128xf32> to vector<512x128xbf16>
    %c0_7 = arith.constant 0 : index
    %c0_8 = arith.constant 0 : index
    %19 = vector.load %arg3[%c0_7, %c0_8] : memref<512x128xbf16, #tpu.memory_space<vmem>>, vector<512x128xbf16>
    tpu.vector_store %arg3[%c0_7, %c0_8], %18 {strides = array<i32>} : memref<512x128xbf16, #tpu.memory_space<vmem>>, vector<512x128xbf16>,
    %20 = arith.truncf %13 : vector<512x128xf32> to vector<512x128xbf16>
    %c0_9 = arith.constant 0 : index
    %c0_10 = arith.constant 0 : index
    %21 = vector.load %arg4[%c0_9, %c0_10] : memref<512x128xbf16, #tpu.memory_space<vmem>>, vector<512x128xbf16>
    tpu.vector_store %arg4[%c0_9, %c0_10], %20 {strides = array<i32>} : memref<512x128xbf16, #tpu.memory_space<vmem>>, vector<512x128xbf16>,
    return
  }
  func.func @transform_0(%arg0: i32) -> (i32, i32) {
    %c0_i32 = arith.constant 0 : i32
    %c0_i32_0 = arith.constant 0 : i32
    return %arg0, %c0_i32 : i32, i32
  }
  func.func @transform_1(%arg0: i32) -> (i32, i32) {
    %c0_i32 = arith.constant 0 : i32
    %c0_i32_0 = arith.constant 0 : i32
    return %arg0, %c0_i32 : i32, i32
  }
  func.func @transform_2(%arg0: i32) -> (i32, i32) {
    %c0_i32 = arith.constant 0 : i32
    %c0_i32_0 = arith.constant 0 : i32
    return %arg0, %c0_i32 : i32, i32
  }
  func.func @transform_3(%arg0: i32) -> (i32, i32) {
    %c0_i32 = arith.constant 0 : i32
    %c0_i32_0 = arith.constant 0 : i32
    return %arg0, %c0_i32 : i32, i32
  }
  func.func @transform_4(%arg0: i32) -> (i32, i32) {
    %c0_i32 = arith.constant 0 : i32
    %c0_i32_0 = arith.constant 0 : i32
    return %arg0, %c0_i32 : i32, i32
  }
}

</mosaic_0001>

<llo_original>
// kernel: tpu_custom_call.1
$region0: #{tpu_custom_call.1}
  #allocation0 [shape = 'u32[]', space=smem, size = 0x4, offset = 0x4, fixed_abs, tag = 'smem constant byte address 0x4 - core index']
  #allocation1 [shape = 'u32[144,128]{1,0:T(1,128)}', space=vmem, size = 0x12000, scoped, tag = 'internal scratch']
  %s0 = inlined_call_operand.hbm [shape: f32[512,128], index: 0, kind: input, shape index: {}]
  %s1 = inlined_call_operand.hbm [shape: f32[512,128], index: 1, kind: input, shape index: {}]
  %s2 = inlined_call_operand.hbm [shape: bf16[512,128], index: 2, kind: output, shape index: {0}]
  %s3 = inlined_call_operand.hbm [shape: bf16[512,128], index: 3, kind: output, shape index: {1}]
  %s4 = inlined_call_operand.vmem [shape: f32[512,1], index: 4, kind: output, shape index: {2}]
  %5 = xla_tuple %s2, %s3, %s4
  %s6 = sld [smem:[#allocation0]]
  $region42: #{tpu_custom_call.1} parent=0
    _
  %s8 = ssub.s32 1, %s6
  %s9 = scalar_select 0, %s8, %s6
  $region1: #{tpu_custom_call.1} parent=0
    #allocation2 [shape = 'u8[262144]{0}', space=vmem, size = 0x40000, scoped, tag = 'input window, operand 0, single buffered']
    #allocation3 [shape = 's32[1]{0}', space=sflag, size = 0x4, scoped, tag = 'scoped memory for tpu_custom_call.1']
    #allocation4 [shape = 's32[1]{0}', space=sflag, size = 0x4, scoped, tag = 'scoped memory for tpu_custom_call.1']
    #allocation5 [shape = 'u8[262144]{0}', space=vmem, size = 0x40000, scoped, tag = 'input window, operand 1, single buffered']
    #allocation6 [shape = 's32[1]{0}', space=sflag, size = 0x4, scoped, tag = 'scoped memory for tpu_custom_call.1']
    #allocation7 [shape = 'u8[131072]{0}', space=vmem, size = 0x20000, scoped, tag = 'output window, operand 0, single buffered']
    #allocation8 [shape = 'u8[131072]{0}', space=vmem, size = 0x20000, scoped, tag = 'output window, operand 1, single buffered']
    #allocation9 [shape = 's32[1]{0}', space=sflag, size = 0x4, scoped, tag = 'scoped memory for tpu_custom_call.1']
    %10 = vsyncpa [#allocation3], 0
    %11 = vsyncpa [#allocation6], 0
    %12 = vsyncpa [#allocation4], 0
    %13 = vsyncpa [#allocation9], 0
    // Predicated region
    $region2: #{tpu_custom_call.1} parent=1 // pred_check
      _
    $region3: #{tpu_custom_call.1} parent=1 // pred_check_branch
      %15 = sbr.rel (0) target = $region5
    $region4: #{tpu_custom_call.1} parent=1 // pred_region
      %s17 = ssub.s32 8192, 8192
      %18 = vsyncadd [#allocation3], %s17
      %s19 = sshll.u32 [#allocation2], 4
      %s20 = int_to_ptr.vmem [resolvable:$true] %s19
      %25 = dma.hbm_to_vmem [thread:$0]  %s0, 8192, %s20, [#allocation3], 128, 128, 8
    $region5: #{tpu_custom_call.1} parent=1 // pred_fallthru
      _
    // Predicated region
    $region6: #{tpu_custom_call.1} parent=1 // pred_check
      _
    $region7: #{tpu_custom_call.1} parent=1 // pred_check_branch
      %27 = sbr.rel (0) target = $region9
    $region8: #{tpu_custom_call.1} parent=1 // pred_region
      %s29 = ssub.s32 8192, 8192
      %30 = vsyncadd [#allocation6], %s29
      %s31 = sshll.u32 [#allocation5], 4
      %s32 = int_to_ptr.vmem [resolvable:$true] %s31
      %37 = dma.hbm_to_vmem [thread:$0]  %s1, 8192, %s32, [#allocation6], 128, 128, 8
    $region9: #{tpu_custom_call.1} parent=1 // pred_fallthru
      _
    // Predicated region
    $region10: #{tpu_custom_call.1} parent=1 // pred_check
      _
    $region11: #{tpu_custom_call.1} parent=1 // pred_check_branch
      %39 = sbr.rel (0) target = $region13
    $region12: #{tpu_custom_call.1} parent=1 // pred_region
      %40 = dma.done [#allocation3], 8192
    $region13: #{tpu_custom_call.1} parent=1 // pred_fallthru
      _
    // Predicated region
    $region14: #{tpu_custom_call.1} parent=1 // pred_check
      _
    $region15: #{tpu_custom_call.1} parent=1 // pred_check_branch
      %42 = sbr.rel (0) target = $region17
    $region16: #{tpu_custom_call.1} parent=1 // pred_region
      %43 = dma.done [#allocation6], 8192
    $region17: #{tpu_custom_call.1} parent=1 // pred_fallthru
      _
    %v44 = vld [vmem:[#allocation2] sm:$0xff]
    %v45 = vld [vmem:[#allocation2 + $0x8] sm:$0xff]
    %v46 = vld [vmem:[#allocation2 + $0x10] sm:$0xff]
    %v47 = vld [vmem:[#allocation2 + $0x18] sm:$0xff]
    %v48 = vld [vmem:[#allocation2 + $0x20] sm:$0xff]
    %v49 = vld [vmem:[#allocation2 + $0x28] sm:$0xff]
    %v50 = vld [vmem:[#allocation2 + $0x30] sm:$0xff]
    %v51 = vld [vmem:[#allocation2 + $0x38] sm:$0xff]
    %v52 = vld [vmem:[#allocation2 + $0x40] sm:$0xff]
    %v53 = vld [vmem:[#allocation2 + $0x48] sm:$0xff]
    %v54 = vld [vmem:[#allocation2 + $0x50] sm:$0xff]
    %v55 = vld [vmem:[#allocation2 + $0x58] sm:$0xff]
    %v56 = vld [vmem:[#allocation2 + $0x60] sm:$0xff]
    %v57 = vld [vmem:[#allocation2 + $0x68] sm:$0xff]
    %v58 = vld [vmem:[#allocation2 + $0x70] sm:$0xff]
    %v59 = vld [vmem:[#allocation2 + $0x78] sm:$0xff]
    %v60 = vld [vmem:[#allocation2 + $0x80] sm:$0xff]
    %v61 = vld [vmem:[#allocation2 + $0x88] sm:$0xff]
    %v62 = vld [vmem:[#allocation2 + $0x90] sm:$0xff]
    %v63 = vld [vmem:[#allocation2 + $0x98] sm:$0xff]
    %v64 = vld [vmem:[#allocation2 + $0xa0] sm:$0xff]
    %v65 = vld [vmem:[#allocation2 + $0xa8] sm:$0xff]
    %v66 = vld [vmem:[#allocation2 + $0xb0] sm:$0xff]
    %v67 = vld [vmem:[#allocation2 + $0xb8] sm:$0xff]
    %v68 = vld [vmem:[#allocation2 + $0xc0] sm:$0xff]
    %v69 = vld [vmem:[#allocation2 + $0xc8] sm:$0xff]
    %v70 = vld [vmem:[#allocation2 + $0xd0] sm:$0xff]
    %v71 = vld [vmem:[#allocation2 + $0xd8] sm:$0xff]
    %v72 = vld [vmem:[#allocation2 + $0xe0] sm:$0xff]
    %v73 = vld [vmem:[#allocation2 + $0xe8] sm:$0xff]
    %v74 = vld [vmem:[#allocation2 + $0xf0] sm:$0xff]
    %v75 = vld [vmem:[#allocation2 + $0xf8] sm:$0xff]
    %v76 = vld [vmem:[#allocation2 + $0x100] sm:$0xff]
    %v77 = vld [vmem:[#allocation2 + $0x108] sm:$0xff]
    %v78 = vld [vmem:[#allocation2 + $0x110] sm:$0xff]
    %v79 = vld [vmem:[#allocation2 + $0x118] sm:$0xff]
    %v80 = vld [vmem:[#allocation2 + $0x120] sm:$0xff]
    %v81 = vld [vmem:[#allocation2 + $0x128] sm:$0xff]
    %v82 = vld [vmem:[#allocation2 + $0x130] sm:$0xff]
    %v83 = vld [vmem:[#allocation2 + $0x138] sm:$0xff]
    %v84 = vld [vmem:[#allocation2 + $0x140] sm:$0xff]
    %v85 = vld [vmem:[#allocation2 + $0x148] sm:$0xff]
    %v86 = vld [vmem:[#allocation2 + $0x150] sm:$0xff]
    %v87 = vld [vmem:[#allocation2 + $0x158] sm:$0xff]
    %v88 = vld [vmem:[#allocation2 + $0x160] sm:$0xff]
    %v89 = vld [vmem:[#allocation2 + $0x168] sm:$0xff]
    %v90 = vld [vmem:[#allocation2 + $0x170] sm:$0xff]
    %v91 = vld [vmem:[#allocation2 + $0x178] sm:$0xff]
    %v92 = vld [vmem:[#allocation2 + $0x180] sm:$0xff]
    %v93 = vld [vmem:[#allocation2 + $0x188] sm:$0xff]
    %v94 = vld [vmem:[#allocation2 + $0x190] sm:$0xff]
    %v95 = vld [vmem:[#allocation2 + $0x198] sm:$0xff]
    %v96 = vld [vmem:[#allocation2 + $0x1a0] sm:$0xff]
    %v97 = vld [vmem:[#allocation2 + $0x1a8] sm:$0xff]
    %v98 = vld [vmem:[#allocation2 + $0x1b0] sm:$0xff]
    %v99 = vld [vmem:[#allocation2 + $0x1b8] sm:$0xff]
    %v100 = vld [vmem:[#allocation2 + $0x1c0] sm:$0xff]
    %v101 = vld [vmem:[#allocation2 + $0x1c8] sm:$0xff]
    %v102 = vld [vmem:[#allocation2 + $0x1d0] sm:$0xff]
    %v103 = vld [vmem:[#allocation2 + $0x1d8] sm:$0xff]
    %v104 = vld [vmem:[#allocation2 + $0x1e0] sm:$0xff]
    %v105 = vld [vmem:[#allocation2 + $0x1e8] sm:$0xff]
    %v106 = vld [vmem:[#allocation2 + $0x1f0] sm:$0xff]
    %v107 = vld [vmem:[#allocation2 + $0x1f8] sm:$0xff]
    %v108 = vld [vmem:[#allocation5] sm:$0xff]
    %v109 = vld [vmem:[#allocation5 + $0x8] sm:$0xff]
    %v110 = vld [vmem:[#allocation5 + $0x10] sm:$0xff]
    %v111 = vld [vmem:[#allocation5 + $0x18] sm:$0xff]
    %v112 = vld [vmem:[#allocation5 + $0x20] sm:$0xff]
    %v113 = vld [vmem:[#allocation5 + $0x28] sm:$0xff]
    %v114 = vld [vmem:[#allocation5 + $0x30] sm:$0xff]
    %v115 = vld [vmem:[#allocation5 + $0x38] sm:$0xff]
    %v116 = vld [vmem:[#allocation5 + $0x40] sm:$0xff]
    %v117 = vld [vmem:[#allocation5 + $0x48] sm:$0xff]
    %v118 = vld [vmem:[#allocation5 + $0x50] sm:$0xff]
    %v119 = vld [vmem:[#allocation5 + $0x58] sm:$0xff]
    %v120 = vld [vmem:[#allocation5 + $0x60] sm:$0xff]
    %v121 = vld [vmem:[#allocation5 + $0x68] sm:$0xff]
    %v122 = vld [vmem:[#allocation5 + $0x70] sm:$0xff]
    %v123 = vld [vmem:[#allocation5 + $0x78] sm:$0xff]
    %v124 = vld [vmem:[#allocation5 + $0x80] sm:$0xff]
    %v125 = vld [vmem:[#allocation5 + $0x88] sm:$0xff]
    %v126 = vld [vmem:[#allocation5 + $0x90] sm:$0xff]
    %v127 = vld [vmem:[#allocation5 + $0x98] sm:$0xff]
    %v128 = vld [vmem:[#allocation5 + $0xa0] sm:$0xff]
    %v129 = vld [vmem:[#allocation5 + $0xa8] sm:$0xff]
    %v130 = vld [vmem:[#allocation5 + $0xb0] sm:$0xff]
    %v131 = vld [vmem:[#allocation5 + $0xb8] sm:$0xff]
    %v132 = vld [vmem:[#allocation5 + $0xc0] sm:$0xff]
    %v133 = vld [vmem:[#allocation5 + $0xc8] sm:$0xff]
    %v134 = vld [vmem:[#allocation5 + $0xd0] sm:$0xff]
    %v135 = vld [vmem:[#allocation5 + $0xd8] sm:$0xff]
    %v136 = vld [vmem:[#allocation5 + $0xe0] sm:$0xff]
    %v137 = vld [vmem:[#allocation5 + $0xe8] sm:$0xff]
    %v138 = vld [vmem:[#allocation5 + $0xf0] sm:$0xff]
    %v139 = vld [vmem:[#allocation5 + $0xf8] sm:$0xff]
    %v140 = vld [vmem:[#allocation5 + $0x100] sm:$0xff]
    %v141 = vld [vmem:[#allocation5 + $0x108] sm:$0xff]
    %v142 = vld [vmem:[#allocation5 + $0x110] sm:$0xff]
    %v143 = vld [vmem:[#allocation5 + $0x118] sm:$0xff]
    %v144 = vld [vmem:[#allocation5 + $0x120] sm:$0xff]
    %v145 = vld [vmem:[#allocation5 + $0x128] sm:$0xff]
    %v146 = vld [vmem:[#allocation5 + $0x130] sm:$0xff]
    %v147 = vld [vmem:[#allocation5 + $0x138] sm:$0xff]
    %v148 = vld [vmem:[#allocation5 + $0x140] sm:$0xff]
    %v149 = vld [vmem:[#allocation5 + $0x148] sm:$0xff]
    %v150 = vld [vmem:[#allocation5 + $0x150] sm:$0xff]
    %v151 = vld [vmem:[#allocation5 + $0x158] sm:$0xff]
    %v152 = vld [vmem:[#allocation5 + $0x160] sm:$0xff]
    %v153 = vld [vmem:[#allocation5 + $0x168] sm:$0xff]
    %v154 = vld [vmem:[#allocation5 + $0x170] sm:$0xff]
    %v155 = vld [vmem:[#allocation5 + $0x178] sm:$0xff]
    %v156 = vld [vmem:[#allocation5 + $0x180] sm:$0xff]
    %v157 = vld [vmem:[#allocation5 + $0x188] sm:$0xff]
    %v158 = vld [vmem:[#allocation5 + $0x190] sm:$0xff]
    %v159 = vld [vmem:[#allocation5 + $0x198] sm:$0xff]
    %v160 = vld [vmem:[#allocation5 + $0x1a0] sm:$0xff]
    %v161 = vld [vmem:[#allocation5 + $0x1a8] sm:$0xff]
    %v162 = vld [vmem:[#allocation5 + $0x1b0] sm:$0xff]
    %v163 = vld [vmem:[#allocation5 + $0x1b8] sm:$0xff]
    %v164 = vld [vmem:[#allocation5 + $0x1c0] sm:$0xff]
    %v165 = vld [vmem:[#allocation5 + $0x1c8] sm:$0xff]
    %v166 = vld [vmem:[#allocation5 + $0x1d0] sm:$0xff]
    %v167 = vld [vmem:[#allocation5 + $0x1d8] sm:$0xff]
    %v168 = vld [vmem:[#allocation5 + $0x1e0] sm:$0xff]
    %v169 = vld [vmem:[#allocation5 + $0x1e8] sm:$0xff]
    %v170 = vld [vmem:[#allocation5 + $0x1f0] sm:$0xff]
    %v171 = vld [vmem:[#allocation5 + $0x1f8] sm:$0xff]
    %v172 = vmul.f32 %v44, %v44
    %v173 = vmul.f32 %v45, %v45
    %v174 = vmul.f32 %v46, %v46
    %v175 = vmul.f32 %v47, %v47
    %v176 = vmul.f32 %v48, %v48
    %v177 = vmul.f32 %v49, %v49
    %v178 = vmul.f32 %v50, %v50
    %v179 = vmul.f32 %v51, %v51
    %v180 = vmul.f32 %v52, %v52
    %v181 = vmul.f32 %v53, %v53
    %v182 = vmul.f32 %v54, %v54
    %v183 = vmul.f32 %v55, %v55
    %v184 = vmul.f32 %v56, %v56
    %v185 = vmul.f32 %v57, %v57
    %v186 = vmul.f32 %v58, %v58
    %v187 = vmul.f32 %v59, %v59
    %v188 = vmul.f32 %v60, %v60
    %v189 = vmul.f32 %v61, %v61
    %v190 = vmul.f32 %v62, %v62
    %v191 = vmul.f32 %v63, %v63
    %v192 = vmul.f32 %v64, %v64
    %v193 = vmul.f32 %v65, %v65
    %v194 = vmul.f32 %v66, %v66
    %v195 = vmul.f32 %v67, %v67
    %v196 = vmul.f32 %v68, %v68
    %v197 = vmul.f32 %v69, %v69
    %v198 = vmul.f32 %v70, %v70
    %v199 = vmul.f32 %v71, %v71
    %v200 = vmul.f32 %v72, %v72
    %v201 = vmul.f32 %v73, %v73
    %v202 = vmul.f32 %v74, %v74
    %v203 = vmul.f32 %v75, %v75
    %v204 = vmul.f32 %v76, %v76
    %v205 = vmul.f32 %v77, %v77
    %v206 = vmul.f32 %v78, %v78
    %v207 = vmul.f32 %v79, %v79
    %v208 = vmul.f32 %v80, %v80
    %v209 = vmul.f32 %v81, %v81
    %v210 = vmul.f32 %v82, %v82
    %v211 = vmul.f32 %v83, %v83
    %v212 = vmul.f32 %v84, %v84
    %v213 = vmul.f32 %v85, %v85
    %v214 = vmul.f32 %v86, %v86
    %v215 = vmul.f32 %v87, %v87
    %v216 = vmul.f32 %v88, %v88
    %v217 = vmul.f32 %v89, %v89
    %v218 = vmul.f32 %v90, %v90
    %v219 = vmul.f32 %v91, %v91
    %v220 = vmul.f32 %v92, %v92
    %v221 = vmul.f32 %v93, %v93
    %v222 = vmul.f32 %v94, %v94
    %v223 = vmul.f32 %v95, %v95
    %v224 = vmul.f32 %v96, %v96
    %v225 = vmul.f32 %v97, %v97
    %v226 = vmul.f32 %v98, %v98
    %v227 = vmul.f32 %v99, %v99
    %v228 = vmul.f32 %v100, %v100
    %v229 = vmul.f32 %v101, %v101
    %v230 = vmul.f32 %v102, %v102
    %v231 = vmul.f32 %v103, %v103
    %v232 = vmul.f32 %v104, %v104
    %v233 = vmul.f32 %v105, %v105
    %v234 = vmul.f32 %v106, %v106
    %v235 = vmul.f32 %v107, %v107
    %236 = vadd.xlane.f32.xlu0 %v172
    %v237 = vpop.xlane.xlu0 %236
    %238 = vadd.xlane.f32.xlu0 %v173
    %v239 = vpop.xlane.xlu0 %238
    %240 = vadd.xlane.f32.xlu0 %v174
    %v241 = vpop.xlane.xlu0 %240
    %242 = vadd.xlane.f32.xlu0 %v175
    %v243 = vpop.xlane.xlu0 %242
    %244 = vadd.xlane.f32.xlu0 %v176
    %v245 = vpop.xlane.xlu0 %244
    %246 = vadd.xlane.f32.xlu0 %v177
    %v247 = vpop.xlane.xlu0 %246
    %248 = vadd.xlane.f32.xlu0 %v178
    %v249 = vpop.xlane.xlu0 %248
    %250 = vadd.xlane.f32.xlu0 %v179
    %v251 = vpop.xlane.xlu0 %250
    %252 = vadd.xlane.f32.xlu0 %v180
    %v253 = vpop.xlane.xlu0 %252
    %254 = vadd.xlane.f32.xlu0 %v181
    %v255 = vpop.xlane.xlu0 %254
    %256 = vadd.xlane.f32.xlu0 %v182
    %v257 = vpop.xlane.xlu0 %256
    %258 = vadd.xlane.f32.xlu0 %v183
    %v259 = vpop.xlane.xlu0 %258
    %260 = vadd.xlane.f32.xlu0 %v184
    %v261 = vpop.xlane.xlu0 %260
    %262 = vadd.xlane.f32.xlu0 %v185
    %v263 = vpop.xlane.xlu0 %262
    %264 = vadd.xlane.f32.xlu0 %v186
    %v265 = vpop.xlane.xlu0 %264
    %266 = vadd.xlane.f32.xlu0 %v187
    %v267 = vpop.xlane.xlu0 %266
    %268 = vadd.xlane.f32.xlu0 %v188
    %v269 = vpop.xlane.xlu0 %268
    %270 = vadd.xlane.f32.xlu0 %v189
    %v271 = vpop.xlane.xlu0 %270
    %272 = vadd.xlane.f32.xlu0 %v190
    %v273 = vpop.xlane.xlu0 %272
    %274 = vadd.xlane.f32.xlu0 %v191
    %v275 = vpop.xlane.xlu0 %274
    %276 = vadd.xlane.f32.xlu0 %v192
    %v277 = vpop.xlane.xlu0 %276
    %278 = vadd.xlane.f32.xlu0 %v193
    %v279 = vpop.xlane.xlu0 %278
    %280 = vadd.xlane.f32.xlu0 %v194
    %v281 = vpop.xlane.xlu0 %280
    %282 = vadd.xlane.f32.xlu0 %v195
    %v283 = vpop.xlane.xlu0 %282
    %284 = vadd.xlane.f32.xlu0 %v196
    %v285 = vpop.xlane.xlu0 %284
    %286 = vadd.xlane.f32.xlu0 %v197
    %v287 = vpop.xlane.xlu0 %286
    %288 = vadd.xlane.f32.xlu0 %v198
    %v289 = vpop.xlane.xlu0 %288
    %290 = vadd.xlane.f32.xlu0 %v199
    %v291 = vpop.xlane.xlu0 %290
    %292 = vadd.xlane.f32.xlu0 %v200
    %v293 = vpop.xlane.xlu0 %292
    %294 = vadd.xlane.f32.xlu0 %v201
    %v295 = vpop.xlane.xlu0 %294
    %296 = vadd.xlane.f32.xlu0 %v202
    %v297 = vpop.xlane.xlu0 %296
    %298 = vadd.xlane.f32.xlu0 %v203
    %v299 = vpop.xlane.xlu0 %298
    %300 = vadd.xlane.f32.xlu0 %v204
    %v301 = vpop.xlane.xlu0 %300
    %302 = vadd.xlane.f32.xlu0 %v205
    %v303 = vpop.xlane.xlu0 %302
    %304 = vadd.xlane.f32.xlu0 %v206
    %v305 = vpop.xlane.xlu0 %304
    %306 = vadd.xlane.f32.xlu0 %v207
    %v307 = vpop.xlane.xlu0 %306
    %308 = vadd.xlane.f32.xlu0 %v208
    %v309 = vpop.xlane.xlu0 %308
    %310 = vadd.xlane.f32.xlu0 %v209
    %v311 = vpop.xlane.xlu0 %310
    %312 = vadd.xlane.f32.xlu0 %v210
    %v313 = vpop.xlane.xlu0 %312
    %314 = vadd.xlane.f32.xlu0 %v211
    %v315 = vpop.xlane.xlu0 %314
    %316 = vadd.xlane.f32.xlu0 %v212
    %v317 = vpop.xlane.xlu0 %316
    %318 = vadd.xlane.f32.xlu0 %v213
    %v319 = vpop.xlane.xlu0 %318
    %320 = vadd.xlane.f32.xlu0 %v214
    %v321 = vpop.xlane.xlu0 %320
    %322 = vadd.xlane.f32.xlu0 %v215
    %v323 = vpop.xlane.xlu0 %322
    %324 = vadd.xlane.f32.xlu0 %v216
    %v325 = vpop.xlane.xlu0 %324
    %326 = vadd.xlane.f32.xlu0 %v217
    %v327 = vpop.xlane.xlu0 %326
    %328 = vadd.xlane.f32.xlu0 %v218
    %v329 = vpop.xlane.xlu0 %328
    %330 = vadd.xlane.f32.xlu0 %v219
    %v331 = vpop.xlane.xlu0 %330
    %332 = vadd.xlane.f32.xlu0 %v220
    %v333 = vpop.xlane.xlu0 %332
    %334 = vadd.xlane.f32.xlu0 %v221
    %v335 = vpop.xlane.xlu0 %334
    %336 = vadd.xlane.f32.xlu0 %v222
    %v337 = vpop.xlane.xlu0 %336
    %338 = vadd.xlane.f32.xlu0 %v223
    %v339 = vpop.xlane.xlu0 %338
    %340 = vadd.xlane.f32.xlu0 %v224
    %v341 = vpop.xlane.xlu0 %340
    %342 = vadd.xlane.f32.xlu0 %v225
    %v343 = vpop.xlane.xlu0 %342
    %344 = vadd.xlane.f32.xlu0 %v226
    %v345 = vpop.xlane.xlu0 %344
    %346 = vadd.xlane.f32.xlu0 %v227
    %v347 = vpop.xlane.xlu0 %346
    %348 = vadd.xlane.f32.xlu0 %v228
    %v349 = vpop.xlane.xlu0 %348
    %350 = vadd.xlane.f32.xlu0 %v229
    %v351 = vpop.xlane.xlu0 %350
    %352 = vadd.xlane.f32.xlu0 %v230
    %v353 = vpop.xlane.xlu0 %352
    %354 = vadd.xlane.f32.xlu0 %v231
    %v355 = vpop.xlane.xlu0 %354
    %356 = vadd.xlane.f32.xlu0 %v232
    %v357 = vpop.xlane.xlu0 %356
    %358 = vadd.xlane.f32.xlu0 %v233
    %v359 = vpop.xlane.xlu0 %358
    %360 = vadd.xlane.f32.xlu0 %v234
    %v361 = vpop.xlane.xlu0 %360
    %362 = vadd.xlane.f32.xlu0 %v235
    %v363 = vpop.xlane.xlu0 %362
    %v364 = vrsqrt.pop %v237
    %v365 = vrsqrt.pop %v239
    %v366 = vrsqrt.pop %v241
    %v367 = vrsqrt.pop %v243
    %v368 = vrsqrt.pop %v245
    %v369 = vrsqrt.pop %v247
    %v370 = vrsqrt.pop %v249
    %v371 = vrsqrt.pop %v251
    %v372 = vrsqrt.pop %v253
    %v373 = vrsqrt.pop %v255
    %v374 = vrsqrt.pop %v257
    %v375 = vrsqrt.pop %v259
    %v376 = vrsqrt.pop %v261
    %v377 = vrsqrt.pop %v263
    %v378 = vrsqrt.pop %v265
    %v379 = vrsqrt.pop %v267
    %v380 = vrsqrt.pop %v269
    %v381 = vrsqrt.pop %v271
    %v382 = vrsqrt.pop %v273
    %v383 = vrsqrt.pop %v275
    %v384 = vrsqrt.pop %v277
    %v385 = vrsqrt.pop %v279
    %v386 = vrsqrt.pop %v281
    %v387 = vrsqrt.pop %v283
    %v388 = vrsqrt.pop %v285
    %v389 = vrsqrt.pop %v287
    %v390 = vrsqrt.pop %v289
    %v391 = vrsqrt.pop %v291
    %v392 = vrsqrt.pop %v293
    %v393 = vrsqrt.pop %v295
    %v394 = vrsqrt.pop %v297
    %v395 = vrsqrt.pop %v299
    %v396 = vrsqrt.pop %v301
    %v397 = vrsqrt.pop %v303
    %v398 = vrsqrt.pop %v305
    %v399 = vrsqrt.pop %v307
    %v400 = vrsqrt.pop %v309
    %v401 = vrsqrt.pop %v311
    %v402 = vrsqrt.pop %v313
    %v403 = vrsqrt.pop %v315
    %v404 = vrsqrt.pop %v317
    %v405 = vrsqrt.pop %v319
    %v406 = vrsqrt.pop %v321
    %v407 = vrsqrt.pop %v323
    %v408 = vrsqrt.pop %v325
    %v409 = vrsqrt.pop %v327
    %v410 = vrsqrt.pop %v329
    %v411 = vrsqrt.pop %v331
    %v412 = vrsqrt.pop %v333
    %v413 = vrsqrt.pop %v335
    %v414 = vrsqrt.pop %v337
    %v415 = vrsqrt.pop %v339
    %v416 = vrsqrt.pop %v341
    %v417 = vrsqrt.pop %v343
    %v418 = vrsqrt.pop %v345
    %v419 = vrsqrt.pop %v347
    %v420 = vrsqrt.pop %v349
    %v421 = vrsqrt.pop %v351
    %v422 = vrsqrt.pop %v353
    %v423 = vrsqrt.pop %v355
    %v424 = vrsqrt.pop %v357
    %v425 = vrsqrt.pop %v359
    %v426 = vrsqrt.pop %v361
    %v427 = vrsqrt.pop %v363
    %v428 = vmul.f32 %v44, %v364
    %v429 = vmul.f32 %v45, %v365
    %v430 = vmul.f32 %v46, %v366
    %v431 = vmul.f32 %v47, %v367
    %v432 = vmul.f32 %v48, %v368
    %v433 = vmul.f32 %v49, %v369
    %v434 = vmul.f32 %v50, %v370
    %v435 = vmul.f32 %v51, %v371
    %v436 = vmul.f32 %v52, %v372
    %v437 = vmul.f32 %v53, %v373
    %v438 = vmul.f32 %v54, %v374
    %v439 = vmul.f32 %v55, %v375
    %v440 = vmul.f32 %v56, %v376
    %v441 = vmul.f32 %v57, %v377
    %v442 = vmul.f32 %v58, %v378
    %v443 = vmul.f32 %v59, %v379
    %v444 = vmul.f32 %v60, %v380
    %v445 = vmul.f32 %v61, %v381
    %v446 = vmul.f32 %v62, %v382
    %v447 = vmul.f32 %v63, %v383
    %v448 = vmul.f32 %v64, %v384
    %v449 = vmul.f32 %v65, %v385
    %v450 = vmul.f32 %v66, %v386
    %v451 = vmul.f32 %v67, %v387
    %v452 = vmul.f32 %v68, %v388
    %v453 = vmul.f32 %v69, %v389
    %v454 = vmul.f32 %v70, %v390
    %v455 = vmul.f32 %v71, %v391
    %v456 = vmul.f32 %v72, %v392
    %v457 = vmul.f32 %v73, %v393
    %v458 = vmul.f32 %v74, %v394
    %v459 = vmul.f32 %v75, %v395
    %v460 = vmul.f32 %v76, %v396
    %v461 = vmul.f32 %v77, %v397
    %v462 = vmul.f32 %v78, %v398
    %v463 = vmul.f32 %v79, %v399
    %v464 = vmul.f32 %v80, %v400
    %v465 = vmul.f32 %v81, %v401
    %v466 = vmul.f32 %v82, %v402
    %v467 = vmul.f32 %v83, %v403
    %v468 = vmul.f32 %v84, %v404
    %v469 = vmul.f32 %v85, %v405
    %v470 = vmul.f32 %v86, %v406
    %v471 = vmul.f32 %v87, %v407
    %v472 = vmul.f32 %v88, %v408
    %v473 = vmul.f32 %v89, %v409
    %v474 = vmul.f32 %v90, %v410
    %v475 = vmul.f32 %v91, %v411
    %v476 = vmul.f32 %v92, %v412
    %v477 = vmul.f32 %v93, %v413
    %v478 = vmul.f32 %v94, %v414
    %v479 = vmul.f32 %v95, %v415
    %v480 = vmul.f32 %v96, %v416
    %v481 = vmul.f32 %v97, %v417
    %v482 = vmul.f32 %v98, %v418
    %v483 = vmul.f32 %v99, %v419
    %v484 = vmul.f32 %v100, %v420
    %v485 = vmul.f32 %v101, %v421
    %v486 = vmul.f32 %v102, %v422
    %v487 = vmul.f32 %v103, %v423
    %v488 = vmul.f32 %v104, %v424
    %v489 = vmul.f32 %v105, %v425
    %v490 = vmul.f32 %v106, %v426
    %v491 = vmul.f32 %v107, %v427
    %v492 = vmul.f32 %v108, %v108
    %v493 = vmul.f32 %v109, %v109
    %v494 = vmul.f32 %v110, %v110
    %v495 = vmul.f32 %v111, %v111
    %v496 = vmul.f32 %v112, %v112
    %v497 = vmul.f32 %v113, %v113
    %v498 = vmul.f32 %v114, %v114
    %v499 = vmul.f32 %v115, %v115
    %v500 = vmul.f32 %v116, %v116
    %v501 = vmul.f32 %v117, %v117
    %v502 = vmul.f32 %v118, %v118
    %v503 = vmul.f32 %v119, %v119
    %v504 = vmul.f32 %v120, %v120
    %v505 = vmul.f32 %v121, %v121
    %v506 = vmul.f32 %v122, %v122
    %v507 = vmul.f32 %v123, %v123
    %v508 = vmul.f32 %v124, %v124
    %v509 = vmul.f32 %v125, %v125
    %v510 = vmul.f32 %v126, %v126
    %v511 = vmul.f32 %v127, %v127
    %v512 = vmul.f32 %v128, %v128
    %v513 = vmul.f32 %v129, %v129
    %v514 = vmul.f32 %v130, %v130
    %v515 = vmul.f32 %v131, %v131
    %v516 = vmul.f32 %v132, %v132
    %v517 = vmul.f32 %v133, %v133
    %v518 = vmul.f32 %v134, %v134
    %v519 = vmul.f32 %v135, %v135
    %v520 = vmul.f32 %v136, %v136
    %v521 = vmul.f32 %v137, %v137
    %v522 = vmul.f32 %v138, %v138
    %v523 = vmul.f32 %v139, %v139
    %v524 = vmul.f32 %v140, %v140
    %v525 = vmul.f32 %v141, %v141
    %v526 = vmul.f32 %v142, %v142
    %v527 = vmul.f32 %v143, %v143
    %v528 = vmul.f32 %v144, %v144
    %v529 = vmul.f32 %v145, %v145
    %v530 = vmul.f32 %v146, %v146
    %v531 = vmul.f32 %v147, %v147
    %v532 = vmul.f32 %v148, %v148
    %v533 = vmul.f32 %v149, %v149
    %v534 = vmul.f32 %v150, %v150
    %v535 = vmul.f32 %v151, %v151
    %v536 = vmul.f32 %v152, %v152
    %v537 = vmul.f32 %v153, %v153
    %v538 = vmul.f32 %v154, %v154
    %v539 = vmul.f32 %v155, %v155
    %v540 = vmul.f32 %v156, %v156
    %v541 = vmul.f32 %v157, %v157
    %v542 = vmul.f32 %v158, %v158
    %v543 = vmul.f32 %v159, %v159
    %v544 = vmul.f32 %v160, %v160
    %v545 = vmul.f32 %v161, %v161
    %v546 = vmul.f32 %v162, %v162
    %v547 = vmul.f32 %v163, %v163
    %v548 = vmul.f32 %v164, %v164
    %v549 = vmul.f32 %v165, %v165
    %v550 = vmul.f32 %v166, %v166
    %v551 = vmul.f32 %v167, %v167
    %v552 = vmul.f32 %v168, %v168
    %v553 = vmul.f32 %v169, %v169
    %v554 = vmul.f32 %v170, %v170
    %v555 = vmul.f32 %v171, %v171
    %556 = vadd.xlane.f32.xlu0 %v492
    %v557 = vpop.xlane.xlu0 %556
    %558 = vadd.xlane.f32.xlu0 %v493
    %v559 = vpop.xlane.xlu0 %558
    %560 = vadd.xlane.f32.xlu0 %v494
    %v561 = vpop.xlane.xlu0 %560
    %562 = vadd.xlane.f32.xlu0 %v495
    %v563 = vpop.xlane.xlu0 %562
    %564 = vadd.xlane.f32.xlu0 %v496
    %v565 = vpop.xlane.xlu0 %564
    %566 = vadd.xlane.f32.xlu0 %v497
    %v567 = vpop.xlane.xlu0 %566
    %568 = vadd.xlane.f32.xlu0 %v498
    %v569 = vpop.xlane.xlu0 %568
    %570 = vadd.xlane.f32.xlu0 %v499
    %v571 = vpop.xlane.xlu0 %570
    %572 = vadd.xlane.f32.xlu0 %v500
    %v573 = vpop.xlane.xlu0 %572
    %574 = vadd.xlane.f32.xlu0 %v501
    %v575 = vpop.xlane.xlu0 %574
    %576 = vadd.xlane.f32.xlu0 %v502
    %v577 = vpop.xlane.xlu0 %576
    %578 = vadd.xlane.f32.xlu0 %v503
    %v579 = vpop.xlane.xlu0 %578
    %580 = vadd.xlane.f32.xlu0 %v504
    %v581 = vpop.xlane.xlu0 %580
    %582 = vadd.xlane.f32.xlu0 %v505
    %v583 = vpop.xlane.xlu0 %582
    %584 = vadd.xlane.f32.xlu0 %v506
    %v585 = vpop.xlane.xlu0 %584
    %586 = vadd.xlane.f32.xlu0 %v507
    %v587 = vpop.xlane.xlu0 %586
    %588 = vadd.xlane.f32.xlu0 %v508
    %v589 = vpop.xlane.xlu0 %588
    %590 = vadd.xlane.f32.xlu0 %v509
    %v591 = vpop.xlane.xlu0 %590
    %592 = vadd.xlane.f32.xlu0 %v510
    %v593 = vpop.xlane.xlu0 %592
    %594 = vadd.xlane.f32.xlu0 %v511
    %v595 = vpop.xlane.xlu0 %594
    %596 = vadd.xlane.f32.xlu0 %v512
    %v597 = vpop.xlane.xlu0 %596
    %598 = vadd.xlane.f32.xlu0 %v513
    %v599 = vpop.xlane.xlu0 %598
    %600 = vadd.xlane.f32.xlu0 %v514
    %v601 = vpop.xlane.xlu0 %600
    %602 = vadd.xlane.f32.xlu0 %v515
    %v603 = vpop.xlane.xlu0 %602
    %604 = vadd.xlane.f32.xlu0 %v516
    %v605 = vpop.xlane.xlu0 %604
    %606 = vadd.xlane.f32.xlu0 %v517
    %v607 = vpop.xlane.xlu0 %606
    %608 = vadd.xlane.f32.xlu0 %v518
    %v609 = vpop.xlane.xlu0 %608
    %610 = vadd.xlane.f32.xlu0 %v519
    %v611 = vpop.xlane.xlu0 %610
    %612 = vadd.xlane.f32.xlu0 %v520
    %v613 = vpop.xlane.xlu0 %612
    %614 = vadd.xlane.f32.xlu0 %v521
    %v615 = vpop.xlane.xlu0 %614
    %616 = vadd.xlane.f32.xlu0 %v522
    %v617 = vpop.xlane.xlu0 %616
    %618 = vadd.xlane.f32.xlu0 %v523
    %v619 = vpop.xlane.xlu0 %618
    %620 = vadd.xlane.f32.xlu0 %v524
    %v621 = vpop.xlane.xlu0 %620
    %622 = vadd.xlane.f32.xlu0 %v525
    %v623 = vpop.xlane.xlu0 %622
    %624 = vadd.xlane.f32.xlu0 %v526
    %v625 = vpop.xlane.xlu0 %624
    %626 = vadd.xlane.f32.xlu0 %v527
    %v627 = vpop.xlane.xlu0 %626
    %628 = vadd.xlane.f32.xlu0 %v528
    %v629 = vpop.xlane.xlu0 %628
    %630 = vadd.xlane.f32.xlu0 %v529
    %v631 = vpop.xlane.xlu0 %630
    %632 = vadd.xlane.f32.xlu0 %v530
    %v633 = vpop.xlane.xlu0 %632
    %634 = vadd.xlane.f32.xlu0 %v531
    %v635 = vpop.xlane.xlu0 %634
    %636 = vadd.xlane.f32.xlu0 %v532
    %v637 = vpop.xlane.xlu0 %636
    %638 = vadd.xlane.f32.xlu0 %v533
    %v639 = vpop.xlane.xlu0 %638
    %640 = vadd.xlane.f32.xlu0 %v534
    %v641 = vpop.xlane.xlu0 %640
    %642 = vadd.xlane.f32.xlu0 %v535
    %v643 = vpop.xlane.xlu0 %642
    %644 = vadd.xlane.f32.xlu0 %v536
    %v645 = vpop.xlane.xlu0 %644
    %646 = vadd.xlane.f32.xlu0 %v537
    %v647 = vpop.xlane.xlu0 %646
    %648 = vadd.xlane.f32.xlu0 %v538
    %v649 = vpop.xlane.xlu0 %648
    %650 = vadd.xlane.f32.xlu0 %v539
    %v651 = vpop.xlane.xlu0 %650
    %652 = vadd.xlane.f32.xlu0 %v540
    %v653 = vpop.xlane.xlu0 %652
    %654 = vadd.xlane.f32.xlu0 %v541
    %v655 = vpop.xlane.xlu0 %654
    %656 = vadd.xlane.f32.xlu0 %v542
    %v657 = vpop.xlane.xlu0 %656
    %658 = vadd.xlane.f32.xlu0 %v543
    %v659 = vpop.xlane.xlu0 %658
    %660 = vadd.xlane.f32.xlu0 %v544
    %v661 = vpop.xlane.xlu0 %660
    %662 = vadd.xlane.f32.xlu0 %v545
    %v663 = vpop.xlane.xlu0 %662
    %664 = vadd.xlane.f32.xlu0 %v546
    %v665 = vpop.xlane.xlu0 %664
    %666 = vadd.xlane.f32.xlu0 %v547
    %v667 = vpop.xlane.xlu0 %666
    %668 = vadd.xlane.f32.xlu0 %v548
    %v669 = vpop.xlane.xlu0 %668
    %670 = vadd.xlane.f32.xlu0 %v549
    %v671 = vpop.xlane.xlu0 %670
    %672 = vadd.xlane.f32.xlu0 %v550
    %v673 = vpop.xlane.xlu0 %672
    %674 = vadd.xlane.f32.xlu0 %v551
    %v675 = vpop.xlane.xlu0 %674
    %676 = vadd.xlane.f32.xlu0 %v552
    %v677 = vpop.xlane.xlu0 %676
    %678 = vadd.xlane.f32.xlu0 %v553
    %v679 = vpop.xlane.xlu0 %678
    %680 = vadd.xlane.f32.xlu0 %v554
    %v681 = vpop.xlane.xlu0 %680
    %682 = vadd.xlane.f32.xlu0 %v555
    %v683 = vpop.xlane.xlu0 %682
    %v684 = vrsqrt.pop %v557
    %v685 = vrsqrt.pop %v559
    %v686 = vrsqrt.pop %v561
    %v687 = vrsqrt.pop %v563
    %v688 = vrsqrt.pop %v565
    %v689 = vrsqrt.pop %v567
    %v690 = vrsqrt.pop %v569
    %v691 = vrsqrt.pop %v571
    %v692 = vrsqrt.pop %v573
    %v693 = vrsqrt.pop %v575
    %v694 = vrsqrt.pop %v577
    %v695 = vrsqrt.pop %v579
    %v696 = vrsqrt.pop %v581
    %v697 = vrsqrt.pop %v583
    %v698 = vrsqrt.pop %v585
    %v699 = vrsqrt.pop %v587
    %v700 = vrsqrt.pop %v589
    %v701 = vrsqrt.pop %v591
    %v702 = vrsqrt.pop %v593
    %v703 = vrsqrt.pop %v595
    %v704 = vrsqrt.pop %v597
    %v705 = vrsqrt.pop %v599
    %v706 = vrsqrt.pop %v601
    %v707 = vrsqrt.pop %v603
    %v708 = vrsqrt.pop %v605
    %v709 = vrsqrt.pop %v607
    %v710 = vrsqrt.pop %v609
    %v711 = vrsqrt.pop %v611
    %v712 = vrsqrt.pop %v613
    %v713 = vrsqrt.pop %v615
    %v714 = vrsqrt.pop %v617
    %v715 = vrsqrt.pop %v619
    %v716 = vrsqrt.pop %v621
    %v717 = vrsqrt.pop %v623
    %v718 = vrsqrt.pop %v625
    %v719 = vrsqrt.pop %v627
    %v720 = vrsqrt.pop %v629
    %v721 = vrsqrt.pop %v631
    %v722 = vrsqrt.pop %v633
    %v723 = vrsqrt.pop %v635
    %v724 = vrsqrt.pop %v637
    %v725 = vrsqrt.pop %v639
    %v726 = vrsqrt.pop %v641
    %v727 = vrsqrt.pop %v643
    %v728 = vrsqrt.pop %v645
    %v729 = vrsqrt.pop %v647
    %v730 = vrsqrt.pop %v649
    %v731 = vrsqrt.pop %v651
    %v732 = vrsqrt.pop %v653
    %v733 = vrsqrt.pop %v655
    %v734 = vrsqrt.pop %v657
    %v735 = vrsqrt.pop %v659
    %v736 = vrsqrt.pop %v661
    %v737 = vrsqrt.pop %v663
    %v738 = vrsqrt.pop %v665
    %v739 = vrsqrt.pop %v667
    %v740 = vrsqrt.pop %v669
    %v741 = vrsqrt.pop %v671
    %v742 = vrsqrt.pop %v673
    %v743 = vrsqrt.pop %v675
    %v744 = vrsqrt.pop %v677
    %v745 = vrsqrt.pop %v679
    %v746 = vrsqrt.pop %v681
    %v747 = vrsqrt.pop %v683
    %v748 = vmul.f32 %v108, %v684
    %v749 = vmul.f32 %v109, %v685
    %v750 = vmul.f32 %v110, %v686
    %v751 = vmul.f32 %v111, %v687
    %v752 = vmul.f32 %v112, %v688
    %v753 = vmul.f32 %v113, %v689
    %v754 = vmul.f32 %v114, %v690
    %v755 = vmul.f32 %v115, %v691
    %v756 = vmul.f32 %v116, %v692
    %v757 = vmul.f32 %v117, %v693
    %v758 = vmul.f32 %v118, %v694
    %v759 = vmul.f32 %v119, %v695
    %v760 = vmul.f32 %v120, %v696
    %v761 = vmul.f32 %v121, %v697
    %v762 = vmul.f32 %v122, %v698
    %v763 = vmul.f32 %v123, %v699
    %v764 = vmul.f32 %v124, %v700
    %v765 = vmul.f32 %v125, %v701
    %v766 = vmul.f32 %v126, %v702
    %v767 = vmul.f32 %v127, %v703
    %v768 = vmul.f32 %v128, %v704
    %v769 = vmul.f32 %v129, %v705
    %v770 = vmul.f32 %v130, %v706
    %v771 = vmul.f32 %v131, %v707
    %v772 = vmul.f32 %v132, %v708
    %v773 = vmul.f32 %v133, %v709
    %v774 = vmul.f32 %v134, %v710
    %v775 = vmul.f32 %v135, %v711
    %v776 = vmul.f32 %v136, %v712
    %v777 = vmul.f32 %v137, %v713
    %v778 = vmul.f32 %v138, %v714
    %v779 = vmul.f32 %v139, %v715
    %v780 = vmul.f32 %v140, %v716
    %v781 = vmul.f32 %v141, %v717
    %v782 = vmul.f32 %v142, %v718
    %v783 = vmul.f32 %v143, %v719
    %v784 = vmul.f32 %v144, %v720
    %v785 = vmul.f32 %v145, %v721
    %v786 = vmul.f32 %v146, %v722
    %v787 = vmul.f32 %v147, %v723
    %v788 = vmul.f32 %v148, %v724
    %v789 = vmul.f32 %v149, %v725
    %v790 = vmul.f32 %v150, %v726
    %v791 = vmul.f32 %v151, %v727
    %v792 = vmul.f32 %v152, %v728
    %v793 = vmul.f32 %v153, %v729
    %v794 = vmul.f32 %v154, %v730
    %v795 = vmul.f32 %v155, %v731
    %v796 = vmul.f32 %v156, %v732
    %v797 = vmul.f32 %v157, %v733
    %v798 = vmul.f32 %v158, %v734
    %v799 = vmul.f32 %v159, %v735
    %v800 = vmul.f32 %v160, %v736
    %v801 = vmul.f32 %v161, %v737
    %v802 = vmul.f32 %v162, %v738
    %v803 = vmul.f32 %v163, %v739
    %v804 = vmul.f32 %v164, %v740
    %v805 = vmul.f32 %v165, %v741
    %v806 = vmul.f32 %v166, %v742
    %v807 = vmul.f32 %v167, %v743
    %v808 = vmul.f32 %v168, %v744
    %v809 = vmul.f32 %v169, %v745
    %v810 = vmul.f32 %v170, %v746
    %v811 = vmul.f32 %v171, %v747
    %v812 = vmul.f32 %v428, %v748
    %v813 = vmul.f32 %v429, %v749
    %v814 = vmul.f32 %v430, %v750
    %v815 = vmul.f32 %v431, %v751
    %v816 = vmul.f32 %v432, %v752
    %v817 = vmul.f32 %v433, %v753
    %v818 = vmul.f32 %v434, %v754
    %v819 = vmul.f32 %v435, %v755
    %v820 = vmul.f32 %v436, %v756
    %v821 = vmul.f32 %v437, %v757
    %v822 = vmul.f32 %v438, %v758
    %v823 = vmul.f32 %v439, %v759
    %v824 = vmul.f32 %v440, %v760
    %v825 = vmul.f32 %v441, %v761
    %v826 = vmul.f32 %v442, %v762
    %v827 = vmul.f32 %v443, %v763
    %v828 = vmul.f32 %v444, %v764
    %v829 = vmul.f32 %v445, %v765
    %v830 = vmul.f32 %v446, %v766
    %v831 = vmul.f32 %v447, %v767
    %v832 = vmul.f32 %v448, %v768
    %v833 = vmul.f32 %v449, %v769
    %v834 = vmul.f32 %v450, %v770
    %v835 = vmul.f32 %v451, %v771
    %v836 = vmul.f32 %v452, %v772
    %v837 = vmul.f32 %v453, %v773
    %v838 = vmul.f32 %v454, %v774
    %v839 = vmul.f32 %v455, %v775
    %v840 = vmul.f32 %v456, %v776
    %v841 = vmul.f32 %v457, %v777
    %v842 = vmul.f32 %v458, %v778
    %v843 = vmul.f32 %v459, %v779
    %v844 = vmul.f32 %v460, %v780
    %v845 = vmul.f32 %v461, %v781
    %v846 = vmul.f32 %v462, %v782
    %v847 = vmul.f32 %v463, %v783
    %v848 = vmul.f32 %v464, %v784
    %v849 = vmul.f32 %v465, %v785
    %v850 = vmul.f32 %v466, %v786
    %v851 = vmul.f32 %v467, %v787
    %v852 = vmul.f32 %v468, %v788
    %v853 = vmul.f32 %v469, %v789
    %v854 = vmul.f32 %v470, %v790
    %v855 = vmul.f32 %v471, %v791
    %v856 = vmul.f32 %v472, %v792
    %v857 = vmul.f32 %v473, %v793
    %v858 = vmul.f32 %v474, %v794
    %v859 = vmul.f32 %v475, %v795
    %v860 = vmul.f32 %v476, %v796
    %v861 = vmul.f32 %v477, %v797
    %v862 = vmul.f32 %v478, %v798
    %v863 = vmul.f32 %v479, %v799
    %v864 = vmul.f32 %v480, %v800
    %v865 = vmul.f32 %v481, %v801
    %v866 = vmul.f32 %v482, %v802
    %v867 = vmul.f32 %v483, %v803
    %v868 = vmul.f32 %v484, %v804
    %v869 = vmul.f32 %v485, %v805
    %v870 = vmul.f32 %v486, %v806
    %v871 = vmul.f32 %v487, %v807
    %v872 = vmul.f32 %v488, %v808
    %v873 = vmul.f32 %v489, %v809
    %v874 = vmul.f32 %v490, %v810
    %v875 = vmul.f32 %v491, %v811
    %876 = vadd.xlane.f32.xlu0 %v812
    %v877 = vpop.xlane.xlu0 %876
    %878 = vadd.xlane.f32.xlu0 %v813
    %v879 = vpop.xlane.xlu0 %878
    %880 = vadd.xlane.f32.xlu0 %v814
    %v881 = vpop.xlane.xlu0 %880
    %882 = vadd.xlane.f32.xlu0 %v815
    %v883 = vpop.xlane.xlu0 %882
    %884 = vadd.xlane.f32.xlu0 %v816
    %v885 = vpop.xlane.xlu0 %884
    %886 = vadd.xlane.f32.xlu0 %v817
    %v887 = vpop.xlane.xlu0 %886
    %888 = vadd.xlane.f32.xlu0 %v818
    %v889 = vpop.xlane.xlu0 %888
    %890 = vadd.xlane.f32.xlu0 %v819
    %v891 = vpop.xlane.xlu0 %890
    %892 = vadd.xlane.f32.xlu0 %v820
    %v893 = vpop.xlane.xlu0 %892
    %894 = vadd.xlane.f32.xlu0 %v821
    %v895 = vpop.xlane.xlu0 %894
    %896 = vadd.xlane.f32.xlu0 %v822
    %v897 = vpop.xlane.xlu0 %896
    %898 = vadd.xlane.f32.xlu0 %v823
    %v899 = vpop.xlane.xlu0 %898
    %900 = vadd.xlane.f32.xlu0 %v824
    %v901 = vpop.xlane.xlu0 %900
    %902 = vadd.xlane.f32.xlu0 %v825
    %v903 = vpop.xlane.xlu0 %902
    %904 = vadd.xlane.f32.xlu0 %v826
    %v905 = vpop.xlane.xlu0 %904
    %906 = vadd.xlane.f32.xlu0 %v827
    %v907 = vpop.xlane.xlu0 %906
    %908 = vadd.xlane.f32.xlu0 %v828
    %v909 = vpop.xlane.xlu0 %908
    %910 = vadd.xlane.f32.xlu0 %v829
    %v911 = vpop.xlane.xlu0 %910
    %912 = vadd.xlane.f32.xlu0 %v830
    %v913 = vpop.xlane.xlu0 %912
    %914 = vadd.xlane.f32.xlu0 %v831
    %v915 = vpop.xlane.xlu0 %914
    %916 = vadd.xlane.f32.xlu0 %v832
    %v917 = vpop.xlane.xlu0 %916
    %918 = vadd.xlane.f32.xlu0 %v833
    %v919 = vpop.xlane.xlu0 %918
    %920 = vadd.xlane.f32.xlu0 %v834
    %v921 = vpop.xlane.xlu0 %920
    %922 = vadd.xlane.f32.xlu0 %v835
    %v923 = vpop.xlane.xlu0 %922
    %924 = vadd.xlane.f32.xlu0 %v836
    %v925 = vpop.xlane.xlu0 %924
    %926 = vadd.xlane.f32.xlu0 %v837
    %v927 = vpop.xlane.xlu0 %926
    %928 = vadd.xlane.f32.xlu0 %v838
    %v929 = vpop.xlane.xlu0 %928
    %930 = vadd.xlane.f32.xlu0 %v839
    %v931 = vpop.xlane.xlu0 %930
    %932 = vadd.xlane.f32.xlu0 %v840
    %v933 = vpop.xlane.xlu0 %932
    %934 = vadd.xlane.f32.xlu0 %v841
    %v935 = vpop.xlane.xlu0 %934
    %936 = vadd.xlane.f32.xlu0 %v842
    %v937 = vpop.xlane.xlu0 %936
    %938 = vadd.xlane.f32.xlu0 %v843
    %v939 = vpop.xlane.xlu0 %938
    %940 = vadd.xlane.f32.xlu0 %v844
    %v941 = vpop.xlane.xlu0 %940
    %942 = vadd.xlane.f32.xlu0 %v845
    %v943 = vpop.xlane.xlu0 %942
    %944 = vadd.xlane.f32.xlu0 %v846
    %v945 = vpop.xlane.xlu0 %944
    %946 = vadd.xlane.f32.xlu0 %v847
    %v947 = vpop.xlane.xlu0 %946
    %948 = vadd.xlane.f32.xlu0 %v848
    %v949 = vpop.xlane.xlu0 %948
    %950 = vadd.xlane.f32.xlu0 %v849
    %v951 = vpop.xlane.xlu0 %950
    %952 = vadd.xlane.f32.xlu0 %v850
    %v953 = vpop.xlane.xlu0 %952
    %954 = vadd.xlane.f32.xlu0 %v851
    %v955 = vpop.xlane.xlu0 %954
    %956 = vadd.xlane.f32.xlu0 %v852
    %v957 = vpop.xlane.xlu0 %956
    %958 = vadd.xlane.f32.xlu0 %v853
    %v959 = vpop.xlane.xlu0 %958
    %960 = vadd.xlane.f32.xlu0 %v854
    %v961 = vpop.xlane.xlu0 %960
    %962 = vadd.xlane.f32.xlu0 %v855
    %v963 = vpop.xlane.xlu0 %962
    %964 = vadd.xlane.f32.xlu0 %v856
    %v965 = vpop.xlane.xlu0 %964
    %966 = vadd.xlane.f32.xlu0 %v857
    %v967 = vpop.xlane.xlu0 %966
    %968 = vadd.xlane.f32.xlu0 %v858
    %v969 = vpop.xlane.xlu0 %968
    %970 = vadd.xlane.f32.xlu0 %v859
    %v971 = vpop.xlane.xlu0 %970
    %972 = vadd.xlane.f32.xlu0 %v860
    %v973 = vpop.xlane.xlu0 %972
    %974 = vadd.xlane.f32.xlu0 %v861
    %v975 = vpop.xlane.xlu0 %974
    %976 = vadd.xlane.f32.xlu0 %v862
    %v977 = vpop.xlane.xlu0 %976
    %978 = vadd.xlane.f32.xlu0 %v863
    %v979 = vpop.xlane.xlu0 %978
    %980 = vadd.xlane.f32.xlu0 %v864
    %v981 = vpop.xlane.xlu0 %980
    %982 = vadd.xlane.f32.xlu0 %v865
    %v983 = vpop.xlane.xlu0 %982
    %984 = vadd.xlane.f32.xlu0 %v866
    %v985 = vpop.xlane.xlu0 %984
    %986 = vadd.xlane.f32.xlu0 %v867
    %v987 = vpop.xlane.xlu0 %986
    %988 = vadd.xlane.f32.xlu0 %v868
    %v989 = vpop.xlane.xlu0 %988
    %990 = vadd.xlane.f32.xlu0 %v869
    %v991 = vpop.xlane.xlu0 %990
    %992 = vadd.xlane.f32.xlu0 %v870
    %v993 = vpop.xlane.xlu0 %992
    %994 = vadd.xlane.f32.xlu0 %v871
    %v995 = vpop.xlane.xlu0 %994
    %996 = vadd.xlane.f32.xlu0 %v872
    %v997 = vpop.xlane.xlu0 %996
    %998 = vadd.xlane.f32.xlu0 %v873
    %v999 = vpop.xlane.xlu0 %998
    %1000 = vadd.xlane.f32.xlu0 %v874
    %v1001 = vpop.xlane.xlu0 %1000
    %1002 = vadd.xlane.f32.xlu0 %v875
    %v1003 = vpop.xlane.xlu0 %1002
    %vm1004 = vcmask 7168
    %1005 = vst.msk [vmem:[%s4] sm:$0xff] %vm1004, %v877
    %1006 = vst.msk [vmem:[%s4 + $0x8] sm:$0xff] %vm1004, %v879
    %1007 = vst.msk [vmem:[%s4 + $0x10] sm:$0xff] %vm1004, %v881
    %1008 = vst.msk [vmem:[%s4 + $0x18] sm:$0xff] %vm1004, %v883
    %1009 = vst.msk [vmem:[%s4 + $0x20] sm:$0xff] %vm1004, %v885
    %1010 = vst.msk [vmem:[%s4 + $0x28] sm:$0xff] %vm1004, %v887
    %1011 = vst.msk [vmem:[%s4 + $0x30] sm:$0xff] %vm1004, %v889
    %1012 = vst.msk [vmem:[%s4 + $0x38] sm:$0xff] %vm1004, %v891
    %1013 = vst.msk [vmem:[%s4 + $0x40] sm:$0xff] %vm1004, %v893
    %1014 = vst.msk [vmem:[%s4 + $0x48] sm:$0xff] %vm1004, %v895
    %1015 = vst.msk [vmem:[%s4 + $0x50] sm:$0xff] %vm1004, %v897
    %1016 = vst.msk [vmem:[%s4 + $0x58] sm:$0xff] %vm1004, %v899
    %1017 = vst.msk [vmem:[%s4 + $0x60] sm:$0xff] %vm1004, %v901
    %1018 = vst.msk [vmem:[%s4 + $0x68] sm:$0xff] %vm1004, %v903
    %1019 = vst.msk [vmem:[%s4 + $0x70] sm:$0xff] %vm1004, %v905
    %1020 = vst.msk [vmem:[%s4 + $0x78] sm:$0xff] %vm1004, %v907
    %1021 = vst.msk [vmem:[%s4 + $0x80] sm:$0xff] %vm1004, %v909
    %1022 = vst.msk [vmem:[%s4 + $0x88] sm:$0xff] %vm1004, %v911
    %1023 = vst.msk [vmem:[%s4 + $0x90] sm:$0xff] %vm1004, %v913
    %1024 = vst.msk [vmem:[%s4 + $0x98] sm:$0xff] %vm1004, %v915
    %1025 = vst.msk [vmem:[%s4 + $0xa0] sm:$0xff] %vm1004, %v917
    %1026 = vst.msk [vmem:[%s4 + $0xa8] sm:$0xff] %vm1004, %v919
    %1027 = vst.msk [vmem:[%s4 + $0xb0] sm:$0xff] %vm1004, %v921
    %1028 = vst.msk [vmem:[%s4 + $0xb8] sm:$0xff] %vm1004, %v923
    %1029 = vst.msk [vmem:[%s4 + $0xc0] sm:$0xff] %vm1004, %v925
    %1030 = vst.msk [vmem:[%s4 + $0xc8] sm:$0xff] %vm1004, %v927
    %1031 = vst.msk [vmem:[%s4 + $0xd0] sm:$0xff] %vm1004, %v929
    %1032 = vst.msk [vmem:[%s4 + $0xd8] sm:$0xff] %vm1004, %v931
    %1033 = vst.msk [vmem:[%s4 + $0xe0] sm:$0xff] %vm1004, %v933
    %1034 = vst.msk [vmem:[%s4 + $0xe8] sm:$0xff] %vm1004, %v935
    %1035 = vst.msk [vmem:[%s4 + $0xf0] sm:$0xff] %vm1004, %v937
    %1036 = vst.msk [vmem:[%s4 + $0xf8] sm:$0xff] %vm1004, %v939
    %1037 = vst.msk [vmem:[%s4 + $0x100] sm:$0xff] %vm1004, %v941
    %1038 = vst.msk [vmem:[%s4 + $0x108] sm:$0xff] %vm1004, %v943
    %1039 = vst.msk [vmem:[%s4 + $0x110] sm:$0xff] %vm1004, %v945
    %1040 = vst.msk [vmem:[%s4 + $0x118] sm:$0xff] %vm1004, %v947
    %1041 = vst.msk [vmem:[%s4 + $0x120] sm:$0xff] %vm1004, %v949
    %1042 = vst.msk [vmem:[%s4 + $0x128] sm:$0xff] %vm1004, %v951
    %1043 = vst.msk [vmem:[%s4 + $0x130] sm:$0xff] %vm1004, %v953
    %1044 = vst.msk [vmem:[%s4 + $0x138] sm:$0xff] %vm1004, %v955
    %1045 = vst.msk [vmem:[%s4 + $0x140] sm:$0xff] %vm1004, %v957
    %1046 = vst.msk [vmem:[%s4 + $0x148] sm:$0xff] %vm1004, %v959
    %1047 = vst.msk [vmem:[%s4 + $0x150] sm:$0xff] %vm1004, %v961
    %1048 = vst.msk [vmem:[%s4 + $0x158] sm:$0xff] %vm1004, %v963
    %1049 = vst.msk [vmem:[%s4 + $0x160] sm:$0xff] %vm1004, %v965
    %1050 = vst.msk [vmem:[%s4 + $0x168] sm:$0xff] %vm1004, %v967
    %1051 = vst.msk [vmem:[%s4 + $0x170] sm:$0xff] %vm1004, %v969
    %1052 = vst.msk [vmem:[%s4 + $0x178] sm:$0xff] %vm1004, %v971
    %1053 = vst.msk [vmem:[%s4 + $0x180] sm:$0xff] %vm1004, %v973
    %1054 = vst.msk [vmem:[%s4 + $0x188] sm:$0xff] %vm1004, %v975
    %1055 = vst.msk [vmem:[%s4 + $0x190] sm:$0xff] %vm1004, %v977
    %1056 = vst.msk [vmem:[%s4 + $0x198] sm:$0xff] %vm1004, %v979
    %1057 = vst.msk [vmem:[%s4 + $0x1a0] sm:$0xff] %vm1004, %v981
    %1058 = vst.msk [vmem:[%s4 + $0x1a8] sm:$0xff] %vm1004, %v983
    %1059 = vst.msk [vmem:[%s4 + $0x1b0] sm:$0xff] %vm1004, %v985
    %1060 = vst.msk [vmem:[%s4 + $0x1b8] sm:$0xff] %vm1004, %v987
    %1061 = vst.msk [vmem:[%s4 + $0x1c0] sm:$0xff] %vm1004, %v989
    %1062 = vst.msk [vmem:[%s4 + $0x1c8] sm:$0xff] %vm1004, %v991
    %1063 = vst.msk [vmem:[%s4 + $0x1d0] sm:$0xff] %vm1004, %v993
    %1064 = vst.msk [vmem:[%s4 + $0x1d8] sm:$0xff] %vm1004, %v995
    %1065 = vst.msk [vmem:[%s4 + $0x1e0] sm:$0xff] %vm1004, %v997
    %1066 = vst.msk [vmem:[%s4 + $0x1e8] sm:$0xff] %vm1004, %v999
    %1067 = vst.msk [vmem:[%s4 + $0x1f0] sm:$0xff] %vm1004, %v1001
    %1068 = vst.msk [vmem:[%s4 + $0x1f8] sm:$0xff] %vm1004, %v1003
    %v1069 = vpack.c.bf16 %v429, %v428
    %v1070 = vpack.c.bf16 %v431, %v430
    %v1071 = vpack.c.bf16 %v433, %v432
    %v1072 = vpack.c.bf16 %v435, %v434
    %v1073 = vpack.c.bf16 %v437, %v436
    %v1074 = vpack.c.bf16 %v439, %v438
    %v1075 = vpack.c.bf16 %v441, %v440
    %v1076 = vpack.c.bf16 %v443, %v442
    %v1077 = vpack.c.bf16 %v445, %v444
    %v1078 = vpack.c.bf16 %v447, %v446
    %v1079 = vpack.c.bf16 %v449, %v448
    %v1080 = vpack.c.bf16 %v451, %v450
    %v1081 = vpack.c.bf16 %v453, %v452
    %v1082 = vpack.c.bf16 %v455, %v454
    %v1083 = vpack.c.bf16 %v457, %v456
    %v1084 = vpack.c.bf16 %v459, %v458
    %v1085 = vpack.c.bf16 %v461, %v460
    %v1086 = vpack.c.bf16 %v463, %v462
    %v1087 = vpack.c.bf16 %v465, %v464
    %v1088 = vpack.c.bf16 %v467, %v466
    %v1089 = vpack.c.bf16 %v469, %v468
    %v1090 = vpack.c.bf16 %v471, %v470
    %v1091 = vpack.c.bf16 %v473, %v472
    %v1092 = vpack.c.bf16 %v475, %v474
    %v1093 = vpack.c.bf16 %v477, %v476
    %v1094 = vpack.c.bf16 %v479, %v478
    %v1095 = vpack.c.bf16 %v481, %v480
    %v1096 = vpack.c.bf16 %v483, %v482
    %v1097 = vpack.c.bf16 %v485, %v484
    %v1098 = vpack.c.bf16 %v487, %v486
    %v1099 = vpack.c.bf16 %v489, %v488
    %v1100 = vpack.c.bf16 %v491, %v490
    %v1133 = vunpack.c.l.b16 %v1069
    %v1134 = vunpack.c.h.b16 %v1069
    %v1135 = vunpack.c.l.b16 %v1070
    %v1136 = vunpack.c.h.b16 %v1070
    %v1137 = vunpack.c.l.b16 %v1071
    %v1138 = vunpack.c.h.b16 %v1071
    %v1139 = vunpack.c.l.b16 %v1072
    %v1140 = vunpack.c.h.b16 %v1072
    %v1141 = vunpack.c.l.b16 %v1073
    %v1142 = vunpack.c.h.b16 %v1073
    %v1143 = vunpack.c.l.b16 %v1074
    %v1144 = vunpack.c.h.b16 %v1074
    %v1145 = vunpack.c.l.b16 %v1075
    %v1146 = vunpack.c.h.b16 %v1075
    %v1147 = vunpack.c.l.b16 %v1076
    %v1148 = vunpack.c.h.b16 %v1076
    %v1149 = vunpack.c.l.b16 %v1077
    %v1150 = vunpack.c.h.b16 %v1077
    %v1151 = vunpack.c.l.b16 %v1078
    %v1152 = vunpack.c.h.b16 %v1078
    %v1153 = vunpack.c.l.b16 %v1079
    %v1154 = vunpack.c.h.b16 %v1079
    %v1155 = vunpack.c.l.b16 %v1080
    %v1156 = vunpack.c.h.b16 %v1080
    %v1157 = vunpack.c.l.b16 %v1081
    %v1158 = vunpack.c.h.b16 %v1081
    %v1159 = vunpack.c.l.b16 %v1082
    %v1160 = vunpack.c.h.b16 %v1082
    %v1161 = vunpack.c.l.b16 %v1083
    %v1162 = vunpack.c.h.b16 %v1083
    %v1163 = vunpack.c.l.b16 %v1084
    %v1164 = vunpack.c.h.b16 %v1084
    %v1165 = vunpack.c.l.b16 %v1085
    %v1166 = vunpack.c.h.b16 %v1085
    %v1167 = vunpack.c.l.b16 %v1086
    %v1168 = vunpack.c.h.b16 %v1086
    %v1169 = vunpack.c.l.b16 %v1087
    %v1170 = vunpack.c.h.b16 %v1087
    %v1171 = vunpack.c.l.b16 %v1088
    %v1172 = vunpack.c.h.b16 %v1088
    %v1173 = vunpack.c.l.b16 %v1089
    %v1174 = vunpack.c.h.b16 %v1089
    %v1175 = vunpack.c.l.b16 %v1090
    %v1176 = vunpack.c.h.b16 %v1090
    %v1177 = vunpack.c.l.b16 %v1091
    %v1178 = vunpack.c.h.b16 %v1091
    %v1179 = vunpack.c.l.b16 %v1092
    %v1180 = vunpack.c.h.b16 %v1092
    %v1181 = vunpack.c.l.b16 %v1093
    %v1182 = vunpack.c.h.b16 %v1093
    %v1183 = vunpack.c.l.b16 %v1094
    %v1184 = vunpack.c.h.b16 %v1094
    %v1185 = vunpack.c.l.b16 %v1095
    %v1186 = vunpack.c.h.b16 %v1095
    %v1187 = vunpack.c.l.b16 %v1096
    %v1188 = vunpack.c.h.b16 %v1096
    %v1189 = vunpack.c.l.b16 %v1097
    %v1190 = vunpack.c.h.b16 %v1097
    %v1191 = vunpack.c.l.b16 %v1098
    %v1192 = vunpack.c.h.b16 %v1098
    %v1193 = vunpack.c.l.b16 %v1099
    %v1194 = vunpack.c.h.b16 %v1099
    %v1195 = vunpack.c.l.b16 %v1100
    %v1196 = vunpack.c.h.b16 %v1100
    %v1197 = vpack.c.b16 %v1133, %v1133
    %v1198 = vpack.c.b16 %v1134, %v1134
    %v1199 = vpack.c.b16 %v1135, %v1135
    %v1200 = vpack.c.b16 %v1136, %v1136
    %v1201 = vpack.c.b16 %v1137, %v1137
    %v1202 = vpack.c.b16 %v1138, %v1138
    %v1203 = vpack.c.b16 %v1139, %v1139
    %v1204 = vpack.c.b16 %v1140, %v1140
    %v1205 = vpack.c.b16 %v1141, %v1141
    %v1206 = vpack.c.b16 %v1142, %v1142
    %v1207 = vpack.c.b16 %v1143, %v1143
    %v1208 = vpack.c.b16 %v1144, %v1144
    %v1209 = vpack.c.b16 %v1145, %v1145
    %v1210 = vpack.c.b16 %v1146, %v1146
    %v1211 = vpack.c.b16 %v1147, %v1147
    %v1212 = vpack.c.b16 %v1148, %v1148
    %v1213 = vpack.c.b16 %v1149, %v1149
    %v1214 = vpack.c.b16 %v1150, %v1150
    %v1215 = vpack.c.b16 %v1151, %v1151
    %v1216 = vpack.c.b16 %v1152, %v1152
    %v1217 = vpack.c.b16 %v1153, %v1153
    %v1218 = vpack.c.b16 %v1154, %v1154
    %v1219 = vpack.c.b16 %v1155, %v1155
    %v1220 = vpack.c.b16 %v1156, %v1156
    %v1221 = vpack.c.b16 %v1157, %v1157
    %v1222 = vpack.c.b16 %v1158, %v1158
    %v1223 = vpack.c.b16 %v1159, %v1159
    %v1224 = vpack.c.b16 %v1160, %v1160
    %v1225 = vpack.c.b16 %v1161, %v1161
    %v1226 = vpack.c.b16 %v1162, %v1162
    %v1227 = vpack.c.b16 %v1163, %v1163
    %v1228 = vpack.c.b16 %v1164, %v1164
    %v1229 = vpack.c.b16 %v1165, %v1165
    %v1230 = vpack.c.b16 %v1166, %v1166
    %v1231 = vpack.c.b16 %v1167, %v1167
    %v1232 = vpack.c.b16 %v1168, %v1168
    %v1233 = vpack.c.b16 %v1169, %v1169
    %v1234 = vpack.c.b16 %v1170, %v1170
    %v1235 = vpack.c.b16 %v1171, %v1171
    %v1236 = vpack.c.b16 %v1172, %v1172
    %v1237 = vpack.c.b16 %v1173, %v1173
    %v1238 = vpack.c.b16 %v1174, %v1174
    %v1239 = vpack.c.b16 %v1175, %v1175
    %v1240 = vpack.c.b16 %v1176, %v1176
    %v1241 = vpack.c.b16 %v1177, %v1177
    %v1242 = vpack.c.b16 %v1178, %v1178
    %v1243 = vpack.c.b16 %v1179, %v1179
    %v1244 = vpack.c.b16 %v1180, %v1180
    %v1245 = vpack.c.b16 %v1181, %v1181
    %v1246 = vpack.c.b16 %v1182, %v1182
    %v1247 = vpack.c.b16 %v1183, %v1183
    %v1248 = vpack.c.b16 %v1184, %v1184
    %v1249 = vpack.c.b16 %v1185, %v1185
    %v1250 = vpack.c.b16 %v1186, %v1186
    %v1251 = vpack.c.b16 %v1187, %v1187
    %v1252 = vpack.c.b16 %v1188, %v1188
    %v1253 = vpack.c.b16 %v1189, %v1189
    %v1254 = vpack.c.b16 %v1190, %v1190
    %v1255 = vpack.c.b16 %v1191, %v1191
    %v1256 = vpack.c.b16 %v1192, %v1192
    %v1257 = vpack.c.b16 %v1193, %v1193
    %v1258 = vpack.c.b16 %v1194, %v1194
    %v1259 = vpack.c.b16 %v1195, %v1195
    %v1260 = vpack.c.b16 %v1196, %v1196
    %1325 = vst [vmem:[#allocation7] sm:$0xf] %v1197
    %1326 = vst [vmem:[#allocation7 + $0x4] sm:$0xf] %v1198
    %1327 = vst [vmem:[#allocation7 + $0x8] sm:$0xf] %v1199
    %1328 = vst [vmem:[#allocation7 + $0xc] sm:$0xf] %v1200
    %1329 = vst [vmem:[#allocation7 + $0x10] sm:$0xf] %v1201
    %1330 = vst [vmem:[#allocation7 + $0x14] sm:$0xf] %v1202
    %1331 = vst [vmem:[#allocation7 + $0x18] sm:$0xf] %v1203
    %1332 = vst [vmem:[#allocation7 + $0x1c] sm:$0xf] %v1204
    %1333 = vst [vmem:[#allocation7 + $0x20] sm:$0xf] %v1205
    %1334 = vst [vmem:[#allocation7 + $0x24] sm:$0xf] %v1206
    %1335 = vst [vmem:[#allocation7 + $0x28] sm:$0xf] %v1207
    %1336 = vst [vmem:[#allocation7 + $0x2c] sm:$0xf] %v1208
    %1337 = vst [vmem:[#allocation7 + $0x30] sm:$0xf] %v1209
    %1338 = vst [vmem:[#allocation7 + $0x34] sm:$0xf] %v1210
    %1339 = vst [vmem:[#allocation7 + $0x38] sm:$0xf] %v1211
    %1340 = vst [vmem:[#allocation7 + $0x3c] sm:$0xf] %v1212
    %1341 = vst [vmem:[#allocation7 + $0x40] sm:$0xf] %v1213
    %1342 = vst [vmem:[#allocation7 + $0x44] sm:$0xf] %v1214
    %1343 = vst [vmem:[#allocation7 + $0x48] sm:$0xf] %v1215
    %1344 = vst [vmem:[#allocation7 + $0x4c] sm:$0xf] %v1216
    %1345 = vst [vmem:[#allocation7 + $0x50] sm:$0xf] %v1217
    %1346 = vst [vmem:[#allocation7 + $0x54] sm:$0xf] %v1218
    %1347 = vst [vmem:[#allocation7 + $0x58] sm:$0xf] %v1219
    %1348 = vst [vmem:[#allocation7 + $0x5c] sm:$0xf] %v1220
    %1349 = vst [vmem:[#allocation7 + $0x60] sm:$0xf] %v1221
    %1350 = vst [vmem:[#allocation7 + $0x64] sm:$0xf] %v1222
    %1351 = vst [vmem:[#allocation7 + $0x68] sm:$0xf] %v1223
    %1352 = vst [vmem:[#allocation7 + $0x6c] sm:$0xf] %v1224
    %1353 = vst [vmem:[#allocation7 + $0x70] sm:$0xf] %v1225
    %1354 = vst [vmem:[#allocation7 + $0x74] sm:$0xf] %v1226
    %1355 = vst [vmem:[#allocation7 + $0x78] sm:$0xf] %v1227
    %1356 = vst [vmem:[#allocation7 + $0x7c] sm:$0xf] %v1228
    %1357 = vst [vmem:[#allocation7 + $0x80] sm:$0xf] %v1229
    %1358 = vst [vmem:[#allocation7 + $0x84] sm:$0xf] %v1230
    %1359 = vst [vmem:[#allocation7 + $0x88] sm:$0xf] %v1231
    %1360 = vst [vmem:[#allocation7 + $0x8c] sm:$0xf] %v1232
    %1361 = vst [vmem:[#allocation7 + $0x90] sm:$0xf] %v1233
    %1362 = vst [vmem:[#allocation7 + $0x94] sm:$0xf] %v1234
    %1363 = vst [vmem:[#allocation7 + $0x98] sm:$0xf] %v1235
    %1364 = vst [vmem:[#allocation7 + $0x9c] sm:$0xf] %v1236
    %1365 = vst [vmem:[#allocation7 + $0xa0] sm:$0xf] %v1237
    %1366 = vst [vmem:[#allocation7 + $0xa4] sm:$0xf] %v1238
    %1367 = vst [vmem:[#allocation7 + $0xa8] sm:$0xf] %v1239
    %1368 = vst [vmem:[#allocation7 + $0xac] sm:$0xf] %v1240
    %1369 = vst [vmem:[#allocation7 + $0xb0] sm:$0xf] %v1241
    %1370 = vst [vmem:[#allocation7 + $0xb4] sm:$0xf] %v1242
    %1371 = vst [vmem:[#allocation7 + $0xb8] sm:$0xf] %v1243
    %1372 = vst [vmem:[#allocation7 + $0xbc] sm:$0xf] %v1244
    %1373 = vst [vmem:[#allocation7 + $0xc0] sm:$0xf] %v1245
    %1374 = vst [vmem:[#allocation7 + $0xc4] sm:$0xf] %v1246
    %1375 = vst [vmem:[#allocation7 + $0xc8] sm:$0xf] %v1247
    %1376 = vst [vmem:[#allocation7 + $0xcc] sm:$0xf] %v1248
    %1377 = vst [vmem:[#allocation7 + $0xd0] sm:$0xf] %v1249
    %1378 = vst [vmem:[#allocation7 + $0xd4] sm:$0xf] %v1250
    %1379 = vst [vmem:[#allocation7 + $0xd8] sm:$0xf] %v1251
    %1380 = vst [vmem:[#allocation7 + $0xdc] sm:$0xf] %v1252
    %1381 = vst [vmem:[#allocation7 + $0xe0] sm:$0xf] %v1253
    %1382 = vst [vmem:[#allocation7 + $0xe4] sm:$0xf] %v1254
    %1383 = vst [vmem:[#allocation7 + $0xe8] sm:$0xf] %v1255
    %1384 = vst [vmem:[#allocation7 + $0xec] sm:$0xf] %v1256
    %1385 = vst [vmem:[#allocation7 + $0xf0] sm:$0xf] %v1257
    %1386 = vst [vmem:[#allocation7 + $0xf4] sm:$0xf] %v1258
    %1387 = vst [vmem:[#allocation7 + $0xf8] sm:$0xf] %v1259
    %1388 = vst [vmem:[#allocation7 + $0xfc] sm:$0xf] %v1260
    %v1389 = vpack.c.bf16 %v749, %v748
    %v1390 = vpack.c.bf16 %v751, %v750
    %v1391 = vpack.c.bf16 %v753, %v752
    %v1392 = vpack.c.bf16 %v755, %v754
    %v1393 = vpack.c.bf16 %v757, %v756
    %v1394 = vpack.c.bf16 %v759, %v758
    %v1395 = vpack.c.bf16 %v761, %v760
    %v1396 = vpack.c.bf16 %v763, %v762
    %v1397 = vpack.c.bf16 %v765, %v764
    %v1398 = vpack.c.bf16 %v767, %v766
    %v1399 = vpack.c.bf16 %v769, %v768
    %v1400 = vpack.c.bf16 %v771, %v770
    %v1401 = vpack.c.bf16 %v773, %v772
    %v1402 = vpack.c.bf16 %v775, %v774
    %v1403 = vpack.c.bf16 %v777, %v776
    %v1404 = vpack.c.bf16 %v779, %v778
    %v1405 = vpack.c.bf16 %v781, %v780
    %v1406 = vpack.c.bf16 %v783, %v782
    %v1407 = vpack.c.bf16 %v785, %v784
    %v1408 = vpack.c.bf16 %v787, %v786
    %v1409 = vpack.c.bf16 %v789, %v788
    %v1410 = vpack.c.bf16 %v791, %v790
    %v1411 = vpack.c.bf16 %v793, %v792
    %v1412 = vpack.c.bf16 %v795, %v794
    %v1413 = vpack.c.bf16 %v797, %v796
    %v1414 = vpack.c.bf16 %v799, %v798
    %v1415 = vpack.c.bf16 %v801, %v800
    %v1416 = vpack.c.bf16 %v803, %v802
    %v1417 = vpack.c.bf16 %v805, %v804
    %v1418 = vpack.c.bf16 %v807, %v806
    %v1419 = vpack.c.bf16 %v809, %v808
    %v1420 = vpack.c.bf16 %v811, %v810
    %v1453 = vunpack.c.l.b16 %v1389
    %v1454 = vunpack.c.h.b16 %v1389
    %v1455 = vunpack.c.l.b16 %v1390
    %v1456 = vunpack.c.h.b16 %v1390
    %v1457 = vunpack.c.l.b16 %v1391
    %v1458 = vunpack.c.h.b16 %v1391
    %v1459 = vunpack.c.l.b16 %v1392
    %v1460 = vunpack.c.h.b16 %v1392
    %v1461 = vunpack.c.l.b16 %v1393
    %v1462 = vunpack.c.h.b16 %v1393
    %v1463 = vunpack.c.l.b16 %v1394
    %v1464 = vunpack.c.h.b16 %v1394
    %v1465 = vunpack.c.l.b16 %v1395
    %v1466 = vunpack.c.h.b16 %v1395
    %v1467 = vunpack.c.l.b16 %v1396
    %v1468 = vunpack.c.h.b16 %v1396
    %v1469 = vunpack.c.l.b16 %v1397
    %v1470 = vunpack.c.h.b16 %v1397
    %v1471 = vunpack.c.l.b16 %v1398
    %v1472 = vunpack.c.h.b16 %v1398
    %v1473 = vunpack.c.l.b16 %v1399
    %v1474 = vunpack.c.h.b16 %v1399
    %v1475 = vunpack.c.l.b16 %v1400
    %v1476 = vunpack.c.h.b16 %v1400
    %v1477 = vunpack.c.l.b16 %v1401
    %v1478 = vunpack.c.h.b16 %v1401
    %v1479 = vunpack.c.l.b16 %v1402
    %v1480 = vunpack.c.h.b16 %v1402
    %v1481 = vunpack.c.l.b16 %v1403
    %v1482 = vunpack.c.h.b16 %v1403
    %v1483 = vunpack.c.l.b16 %v1404
    %v1484 = vunpack.c.h.b16 %v1404
    %v1485 = vunpack.c.l.b16 %v1405
    %v1486 = vunpack.c.h.b16 %v1405
    %v1487 = vunpack.c.l.b16 %v1406
    %v1488 = vunpack.c.h.b16 %v1406
    %v1489 = vunpack.c.l.b16 %v1407
    %v1490 = vunpack.c.h.b16 %v1407
    %v1491 = vunpack.c.l.b16 %v1408
    %v1492 = vunpack.c.h.b16 %v1408
    %v1493 = vunpack.c.l.b16 %v1409
    %v1494 = vunpack.c.h.b16 %v1409
    %v1495 = vunpack.c.l.b16 %v1410
    %v1496 = vunpack.c.h.b16 %v1410
    %v1497 = vunpack.c.l.b16 %v1411
    %v1498 = vunpack.c.h.b16 %v1411
    %v1499 = vunpack.c.l.b16 %v1412
    %v1500 = vunpack.c.h.b16 %v1412
    %v1501 = vunpack.c.l.b16 %v1413
    %v1502 = vunpack.c.h.b16 %v1413
    %v1503 = vunpack.c.l.b16 %v1414
    %v1504 = vunpack.c.h.b16 %v1414
    %v1505 = vunpack.c.l.b16 %v1415
    %v1506 = vunpack.c.h.b16 %v1415
    %v1507 = vunpack.c.l.b16 %v1416
    %v1508 = vunpack.c.h.b16 %v1416
    %v1509 = vunpack.c.l.b16 %v1417
    %v1510 = vunpack.c.h.b16 %v1417
    %v1511 = vunpack.c.l.b16 %v1418
    %v1512 = vunpack.c.h.b16 %v1418
    %v1513 = vunpack.c.l.b16 %v1419
    %v1514 = vunpack.c.h.b16 %v1419
    %v1515 = vunpack.c.l.b16 %v1420
    %v1516 = vunpack.c.h.b16 %v1420
    %v1517 = vpack.c.b16 %v1453, %v1453
    %v1518 = vpack.c.b16 %v1454, %v1454
    %v1519 = vpack.c.b16 %v1455, %v1455
    %v1520 = vpack.c.b16 %v1456, %v1456
    %v1521 = vpack.c.b16 %v1457, %v1457
    %v1522 = vpack.c.b16 %v1458, %v1458
    %v1523 = vpack.c.b16 %v1459, %v1459
    %v1524 = vpack.c.b16 %v1460, %v1460
    %v1525 = vpack.c.b16 %v1461, %v1461
    %v1526 = vpack.c.b16 %v1462, %v1462
    %v1527 = vpack.c.b16 %v1463, %v1463
    %v1528 = vpack.c.b16 %v1464, %v1464
    %v1529 = vpack.c.b16 %v1465, %v1465
    %v1530 = vpack.c.b16 %v1466, %v1466
    %v1531 = vpack.c.b16 %v1467, %v1467
    %v1532 = vpack.c.b16 %v1468, %v1468
    %v1533 = vpack.c.b16 %v1469, %v1469
    %v1534 = vpack.c.b16 %v1470, %v1470
    %v1535 = vpack.c.b16 %v1471, %v1471
    %v1536 = vpack.c.b16 %v1472, %v1472
    %v1537 = vpack.c.b16 %v1473, %v1473
    %v1538 = vpack.c.b16 %v1474, %v1474
    %v1539 = vpack.c.b16 %v1475, %v1475
    %v1540 = vpack.c.b16 %v1476, %v1476
    %v1541 = vpack.c.b16 %v1477, %v1477
    %v1542 = vpack.c.b16 %v1478, %v1478
    %v1543 = vpack.c.b16 %v1479, %v1479
    %v1544 = vpack.c.b16 %v1480, %v1480
    %v1545 = vpack.c.b16 %v1481, %v1481
    %v1546 = vpack.c.b16 %v1482, %v1482
    %v1547 = vpack.c.b16 %v1483, %v1483
    %v1548 = vpack.c.b16 %v1484, %v1484
    %v1549 = vpack.c.b16 %v1485, %v1485
    %v1550 = vpack.c.b16 %v1486, %v1486
    %v1551 = vpack.c.b16 %v1487, %v1487
    %v1552 = vpack.c.b16 %v1488, %v1488
    %v1553 = vpack.c.b16 %v1489, %v1489
    %v1554 = vpack.c.b16 %v1490, %v1490
    %v1555 = vpack.c.b16 %v1491, %v1491
    %v1556 = vpack.c.b16 %v1492, %v1492
    %v1557 = vpack.c.b16 %v1493, %v1493
    %v1558 = vpack.c.b16 %v1494, %v1494
    %v1559 = vpack.c.b16 %v1495, %v1495
    %v1560 = vpack.c.b16 %v1496, %v1496
    %v1561 = vpack.c.b16 %v1497, %v1497
    %v1562 = vpack.c.b16 %v1498, %v1498
    %v1563 = vpack.c.b16 %v1499, %v1499
    %v1564 = vpack.c.b16 %v1500, %v1500
    %v1565 = vpack.c.b16 %v1501, %v1501
    %v1566 = vpack.c.b16 %v1502, %v1502
    %v1567 = vpack.c.b16 %v1503, %v1503
    %v1568 = vpack.c.b16 %v1504, %v1504
    %v1569 = vpack.c.b16 %v1505, %v1505
    %v1570 = vpack.c.b16 %v1506, %v1506
    %v1571 = vpack.c.b16 %v1507, %v1507
    %v1572 = vpack.c.b16 %v1508, %v1508
    %v1573 = vpack.c.b16 %v1509, %v1509
    %v1574 = vpack.c.b16 %v1510, %v1510
    %v1575 = vpack.c.b16 %v1511, %v1511
    %v1576 = vpack.c.b16 %v1512, %v1512
    %v1577 = vpack.c.b16 %v1513, %v1513
    %v1578 = vpack.c.b16 %v1514, %v1514
    %v1579 = vpack.c.b16 %v1515, %v1515
    %v1580 = vpack.c.b16 %v1516, %v1516
    %1645 = vst [vmem:[#allocation8] sm:$0xf] %v1517
    %1646 = vst [vmem:[#allocation8 + $0x4] sm:$0xf] %v1518
    %1647 = vst [vmem:[#allocation8 + $0x8] sm:$0xf] %v1519
    %1648 = vst [vmem:[#allocation8 + $0xc] sm:$0xf] %v1520
    %1649 = vst [vmem:[#allocation8 + $0x10] sm:$0xf] %v1521
    %1650 = vst [vmem:[#allocation8 + $0x14] sm:$0xf] %v1522
    %1651 = vst [vmem:[#allocation8 + $0x18] sm:$0xf] %v1523
    %1652 = vst [vmem:[#allocation8 + $0x1c] sm:$0xf] %v1524
    %1653 = vst [vmem:[#allocation8 + $0x20] sm:$0xf] %v1525
    %1654 = vst [vmem:[#allocation8 + $0x24] sm:$0xf] %v1526
    %1655 = vst [vmem:[#allocation8 + $0x28] sm:$0xf] %v1527
    %1656 = vst [vmem:[#allocation8 + $0x2c] sm:$0xf] %v1528
    %1657 = vst [vmem:[#allocation8 + $0x30] sm:$0xf] %v1529
    %1658 = vst [vmem:[#allocation8 + $0x34] sm:$0xf] %v1530
    %1659 = vst [vmem:[#allocation8 + $0x38] sm:$0xf] %v1531
    %1660 = vst [vmem:[#allocation8 + $0x3c] sm:$0xf] %v1532
    %1661 = vst [vmem:[#allocation8 + $0x40] sm:$0xf] %v1533
    %1662 = vst [vmem:[#allocation8 + $0x44] sm:$0xf] %v1534
    %1663 = vst [vmem:[#allocation8 + $0x48] sm:$0xf] %v1535
    %1664 = vst [vmem:[#allocation8 + $0x4c] sm:$0xf] %v1536
    %1665 = vst [vmem:[#allocation8 + $0x50] sm:$0xf] %v1537
    %1666 = vst [vmem:[#allocation8 + $0x54] sm:$0xf] %v1538
    %1667 = vst [vmem:[#allocation8 + $0x58] sm:$0xf] %v1539
    %1668 = vst [vmem:[#allocation8 + $0x5c] sm:$0xf] %v1540
    %1669 = vst [vmem:[#allocation8 + $0x60] sm:$0xf] %v1541
    %1670 = vst [vmem:[#allocation8 + $0x64] sm:$0xf] %v1542
    %1671 = vst [vmem:[#allocation8 + $0x68] sm:$0xf] %v1543
    %1672 = vst [vmem:[#allocation8 + $0x6c] sm:$0xf] %v1544
    %1673 = vst [vmem:[#allocation8 + $0x70] sm:$0xf] %v1545
    %1674 = vst [vmem:[#allocation8 + $0x74] sm:$0xf] %v1546
    %1675 = vst [vmem:[#allocation8 + $0x78] sm:$0xf] %v1547
    %1676 = vst [vmem:[#allocation8 + $0x7c] sm:$0xf] %v1548
    %1677 = vst [vmem:[#allocation8 + $0x80] sm:$0xf] %v1549
    %1678 = vst [vmem:[#allocation8 + $0x84] sm:$0xf] %v1550
    %1679 = vst [vmem:[#allocation8 + $0x88] sm:$0xf] %v1551
    %1680 = vst [vmem:[#allocation8 + $0x8c] sm:$0xf] %v1552
    %1681 = vst [vmem:[#allocation8 + $0x90] sm:$0xf] %v1553
    %1682 = vst [vmem:[#allocation8 + $0x94] sm:$0xf] %v1554
    %1683 = vst [vmem:[#allocation8 + $0x98] sm:$0xf] %v1555
    %1684 = vst [vmem:[#allocation8 + $0x9c] sm:$0xf] %v1556
    %1685 = vst [vmem:[#allocation8 + $0xa0] sm:$0xf] %v1557
    %1686 = vst [vmem:[#allocation8 + $0xa4] sm:$0xf] %v1558
    %1687 = vst [vmem:[#allocation8 + $0xa8] sm:$0xf] %v1559
    %1688 = vst [vmem:[#allocation8 + $0xac] sm:$0xf] %v1560
    %1689 = vst [vmem:[#allocation8 + $0xb0] sm:$0xf] %v1561
    %1690 = vst [vmem:[#allocation8 + $0xb4] sm:$0xf] %v1562
    %1691 = vst [vmem:[#allocation8 + $0xb8] sm:$0xf] %v1563
    %1692 = vst [vmem:[#allocation8 + $0xbc] sm:$0xf] %v1564
    %1693 = vst [vmem:[#allocation8 + $0xc0] sm:$0xf] %v1565
    %1694 = vst [vmem:[#allocation8 + $0xc4] sm:$0xf] %v1566
    %1695 = vst [vmem:[#allocation8 + $0xc8] sm:$0xf] %v1567
    %1696 = vst [vmem:[#allocation8 + $0xcc] sm:$0xf] %v1568
    %1697 = vst [vmem:[#allocation8 + $0xd0] sm:$0xf] %v1569
    %1698 = vst [vmem:[#allocation8 + $0xd4] sm:$0xf] %v1570
    %1699 = vst [vmem:[#allocation8 + $0xd8] sm:$0xf] %v1571
    %1700 = vst [vmem:[#allocation8 + $0xdc] sm:$0xf] %v1572
    %1701 = vst [vmem:[#allocation8 + $0xe0] sm:$0xf] %v1573
    %1702 = vst [vmem:[#allocation8 + $0xe4] sm:$0xf] %v1574
    %1703 = vst [vmem:[#allocation8 + $0xe8] sm:$0xf] %v1575
    %1704 = vst [vmem:[#allocation8 + $0xec] sm:$0xf] %v1576
    %1705 = vst [vmem:[#allocation8 + $0xf0] sm:$0xf] %v1577
    %1706 = vst [vmem:[#allocation8 + $0xf4] sm:$0xf] %v1578
    %1707 = vst [vmem:[#allocation8 + $0xf8] sm:$0xf] %v1579
    %1708 = vst [vmem:[#allocation8 + $0xfc] sm:$0xf] %v1580
    // Predicated region
    $region18: #{tpu_custom_call.1} parent=1 // pred_check
      _
    $region19: #{tpu_custom_call.1} parent=1 // pred_check_branch
      %1710 = sbr.rel (0) target = $region21
    $region20: #{tpu_custom_call.1} parent=1 // pred_region
      %s1712 = ssub.s32 4096, 4096
      %1713 = vsyncadd [#allocation4], %s1712
      %s1714 = sshll.u32 [#allocation7], 4
      %s1715 = int_to_ptr.vmem [resolvable:$true] %s1714
      %1720 = dma.vmem_to_hbm [thread:$0]  %s1715, 4096, %s2, [#allocation4], 64, 64, 4
    $region21: #{tpu_custom_call.1} parent=1 // pred_fallthru
      _
    // Predicated region
    $region22: #{tpu_custom_call.1} parent=1 // pred_check
      _
    $region23: #{tpu_custom_call.1} parent=1 // pred_check_branch
      %1722 = sbr.rel (0) target = $region25
    $region24: #{tpu_custom_call.1} parent=1 // pred_region
      %s1724 = ssub.s32 4096, 4096
      %1725 = vsyncadd [#allocation9], %s1724
      %s1726 = sshll.u32 [#allocation8], 4
      %s1727 = int_to_ptr.vmem [resolvable:$true] %s1726
      %1732 = dma.vmem_to_hbm [thread:$0]  %s1727, 4096, %s3, [#allocation9], 64, 64, 4
    $region25: #{tpu_custom_call.1} parent=1 // pred_fallthru
      _
    // Predicated region
    $region26: #{tpu_custom_call.1} parent=1 // pred_check
      _
    $region27: #{tpu_custom_call.1} parent=1 // pred_check_branch
      %1734 = sbr.rel (0) target = $region29
    $region28: #{tpu_custom_call.1} parent=1 // pred_region
      _
    $region29: #{tpu_custom_call.1} parent=1 // pred_fallthru
      _
    // Predicated region
    $region30: #{tpu_custom_call.1} parent=1 // pred_check
      _
    $region31: #{tpu_custom_call.1} parent=1 // pred_check_branch
      %1736 = sbr.rel (0) target = $region33
    $region32: #{tpu_custom_call.1} parent=1 // pred_region
      %1737 = dma.done [#allocation4], 4096
    $region33: #{tpu_custom_call.1} parent=1 // pred_fallthru
      _
    // Predicated region
    $region34: #{tpu_custom_call.1} parent=1 // pred_check
      _
    $region35: #{tpu_custom_call.1} parent=1 // pred_check_branch
      %1739 = sbr.rel (0) target = $region37
    $region36: #{tpu_custom_call.1} parent=1 // pred_region
      %1740 = dma.done [#allocation9], 4096
    $region37: #{tpu_custom_call.1} parent=1 // pred_fallthru
      _
    // Predicated region
    $region38: #{tpu_custom_call.1} parent=1 // pred_check
      _
    $region39: #{tpu_custom_call.1} parent=1 // pred_check_branch
      %1742 = sbr.rel (0) target = $region41
    $region40: #{tpu_custom_call.1} parent=1 // pred_region
      _
    $region41: #{tpu_custom_call.1} parent=1 // pred_fallthru
      _
    %1743 = vsyncpa [#allocation3], 1
    %1744 = vsyncpa [#allocation6], 1
    %1745 = vsyncpa [#allocation4], 1
    %1746 = vsyncpa [#allocation9], 1

</llo_original>
